<compile_context>
chip_gen: v6e
topology: v6e:2x2x1
jax: 0.10.0
libtpu: 0.0.40
codegen_flags: <defaults>
</compile_context>

<pallas_src>
import functools

import jax
import jax.numpy as jnp
from jax import lax
from jax.experimental import pallas as pl
from jax.experimental.pallas import tpu as pltpu


def _make_divisible(v, divisor, min_value=None):
    if min_value is None:
        min_value = divisor
    new_v = max(min_value, int(v + divisor / 2) // divisor * divisor)
    if new_v < 0.9 * v:
        new_v += divisor
    return new_v


def _inverted_residual_kernel(x_ref, w1_ref, wdw_ref, wr_ref, we_ref, w3_ref,
                              pos_ref, p_ref, o_ref, *, H, W, K, mm_dtype):
    NB, Cin, HW = x_ref.shape
    Chid = w1_ref.shape[0]
    Cout = w3_ref.shape[0]
    reduced = wr_ref.shape[0]
    P = (K - 1) // 2
    f32 = jnp.float32

    def hsig(v):  # h_sigmoid: relu6(v + 3) / 6
        return jnp.clip(v + 3.0, 0.0, 6.0) * (1.0 / 6.0)

    def rows(v):
        # per-channel constant -> per-row constant on the (NB*C, HW) view
        return v if NB == 1 else jnp.concatenate([v] * NB, axis=0)

    def conv1x1(w, a2, ci, co):
        # w: (co, ci); a2: (NB*ci, HW), rows ordered (image, channel)
        wq = w.astype(mm_dtype)
        aq = a2.astype(mm_dtype)
        if NB == 1:
            return jnp.dot(wq, aq, preferred_element_type=f32)
        out = lax.dot_general(
            jnp.broadcast_to(wq[None], (NB, co, ci)),
            aq.reshape(NB, ci, HW),
            (((2,), (1,)), ((0,), (0,))),
            preferred_element_type=f32)
        return out.reshape(NB * co, HW)

    # ---- packed per-channel params: columns [s1 b1 s2 b2 be br s3 b3] ----
    pp = p_ref[...]                                   # (Cmax, 8)
    s1, b1 = pp[:Chid, 0:1], pp[:Chid, 1:2]
    s2, b2 = pp[:Chid, 2:3], pp[:Chid, 3:4]
    be, br = pp[:Chid, 4:5], pp[:reduced, 5:6]
    s3, b3 = pp[:Cout, 6:7], pp[:Cout, 7:8]

    posv = pos_ref[...]                               # (2, HW) int32
    wpos = posv[0:1, :]                               # column index within a row
    hpos = posv[1:2, :]                               # row index within an image

    x2 = x_ref[...].reshape(NB * Cin, HW).astype(f32)

    # ---- 1x1 expand conv + BN(folded) + h_swish ----
    h = conv1x1(w1_ref[...], x2, Cin, Chid)           # (NB*Chid, HW) f32
    h = h * rows(s1) + rows(b1)
    h = h * hsig(h)

    # ---- depthwise KxK conv (stride 1, zero-pad P): roll + per-tap mask ----
    wrows = rows(wdw_ref[...])                        # (NB*Chid, K*K)
    ctr = P * K + P
    acc = h * wrows[:, ctr:ctr + 1]                   # center tap seeds acc
    for dy in range(K):
        oy = dy - P
        for dx in range(K):
            ox = dx - P
            if oy == 0 and ox == 0:
                continue
            off = oy * W + ox
            src = pltpu.roll(h, (-off) % HW, 1)
            # boundary mask recomputed per tap; (1, HW) broadcasts over rows
            m = None
            if oy < 0:
                m = hpos >= -oy
            elif oy > 0:
                m = hpos < H - oy
            if ox < 0:
                wm = wpos >= -ox
            elif ox > 0:
                wm = wpos < W - ox
            else:
                wm = None
            if m is None:
                m = wm
            elif wm is not None:
                m = jnp.logical_and(m, wm)
            src = jnp.where(m, src, 0.0)
            acc = acc + src * wrows[:, dy * K + dx:dy * K + dx + 1]

    d = acc * rows(s2) + rows(b2)                     # BN(folded)

    # ---- Squeeze-Excite (lane-axis pooling, column-layout tiny matmuls) ----
    pooled = jnp.sum(acc, axis=1, keepdims=True) * (1.0 / HW)   # (NB*Chid, 1)
    if NB == 1:
        pooled_cb = pooled                                       # (Chid, 1)
    else:
        pooled_cb = jnp.concatenate(
            [pooled[b * Chid:(b + 1) * Chid] for b in range(NB)], axis=1)
    pooled_cb = pooled_cb * s2 + b2                   # BN folds through the mean
    r = jnp.dot(wr_ref[...], pooled_cb, preferred_element_type=f32) + br
    r = jnp.maximum(r, 0.0)
    e = jnp.dot(we_ref[...], r, preferred_element_type=f32) + be  # (Chid, NB)
    gate = hsig(e)
    if NB == 1:
        grows = gate                                   # (Chid, 1)
    else:
        grows = jnp.concatenate([gate[:, b:b + 1] for b in range(NB)], axis=0)
    d = d * grows

    # ---- h_swish ----
    d = d * hsig(d)

    # ---- 1x1 project conv + BN(folded) + identity residual ----
    y = conv1x1(w3_ref[...], d, Chid, Cout)           # (NB*Cout, HW)
    y = y * rows(s3) + rows(b3)
    o_ref[...] = (y + x2).reshape(NB, Cout, HW).astype(o_ref.dtype)


def inverted_residual(x, kparams, kernel_size, block_n=None,
                      matmul_dtype=jnp.float32):
    """x: (N, Cin, H, W) NCHW (same as PyTorch).  Returns (N, Cout, H, W).

    No host-side transposes: only free (N, C, H, W) -> (N, C, H*W) reshapes on
    either side of the kernel.  Pass matmul_dtype=jnp.bfloat16 on v6e/v7x to
    halve MXU passes (accumulation stays f32); keep f32 on v5e.
    """
    N, Cin, H, W = x.shape
    K = kernel_size
    Chid = kparams["w1"].shape[0]
    Cout = kparams["w3"].shape[0]
    reduced = kparams["wr"].shape[0]
    assert Cin == Cout, "this instance uses the identity-residual path"
    HW = H * W

    # Images per grid step: keep >= 2 grid steps (pipelining overlap + v7x
    # megacore) while targeting a few-thousand-lane block for realistic N.
    if block_n is None:
        block_n = 1
        target = max(1, 8192 // HW)
        for nb in range(min(N // 2, target), 0, -1):
            if N % nb == 0:
                block_n = nb
                break
    assert N % block_n == 0
    nsteps = N // block_n

    # Pack per-channel scale/bias vectors into one slab (fewer operands/DMAs).
    Cmax = max(Chid, Cout, reduced)

    def col(v):
        return jnp.pad(v, (0, Cmax - v.shape[0]))

    pslab = jnp.stack(
        [col(kparams["s1"]), col(kparams["b1"]),
         col(kparams["s2"]), col(kparams["b2"]),
         col(kparams["be"]), col(kparams["br"]),
         col(kparams["s3"]), col(kparams["b3"])], axis=1)        # (Cmax, 8)

    wdw2 = kparams["wdw"].reshape(Chid, K * K)

    # Precomputed (2, HW) int32 position map: avoids per-lane div/mod in the
    # VPU-bound tap loop (matters for non-power-of-two H/W).
    lane = jnp.arange(HW, dtype=jnp.int32)
    pos = jnp.stack([lane % W, lane // W], axis=0)

    x_r = x.reshape(N, Cin, HW)                       # free reshape, no transpose

    kernel = functools.partial(_inverted_residual_kernel, H=H, W=W, K=K,
                               mm_dtype=matmul_dtype)

    out = pl.pallas_call(
        kernel,
        out_shape=jax.ShapeDtypeStruct((N, Cout, HW), x.dtype),
        grid_spec=pltpu.PrefetchScalarGridSpec(
            num_scalar_prefetch=0,
            grid=(nsteps,),
            in_specs=[
                pl.BlockSpec((block_n, Cin, HW), lambda n: (n, 0, 0)),
                pl.BlockSpec((Chid, Cin), lambda n: (0, 0)),
                pl.BlockSpec((Chid, K * K), lambda n: (0, 0)),
                pl.BlockSpec((reduced, Chid), lambda n: (0, 0)),
                pl.BlockSpec((Chid, reduced), lambda n: (0, 0)),
                pl.BlockSpec((Cout, Chid), lambda n: (0, 0)),
                pl.BlockSpec((2, HW), lambda n: (0, 0)),
                pl.BlockSpec((Cmax, 8), lambda n: (0, 0)),
            ],
            out_specs=pl.BlockSpec((block_n, Cout, HW), lambda n: (n, 0, 0)),
        ),
        compiler_params=pltpu.CompilerParams(
            dimension_semantics=("parallel",),
            vmem_limit_bytes=32 * 1024 * 1024),
    )(x_r, kparams["w1"], wdw2, kparams["wr"], kparams["we"], kparams["w3"],
      pos, pslab)

    return out.reshape(N, Cout, H, W)


def init_params(key, inp, hidden_dim, oup, kernel_size, se_ratio=0.25,
                divisor=8, eps=1e-5):
    reduced = _make_divisible(hidden_dim * se_ratio, divisor)
    ks = jax.random.split(key, 19)

    def nrm(k, shape, scale):
        return scale * jax.random.normal(k, shape, jnp.float32)

    raw = dict(
        w1=nrm(ks[0], (hidden_dim, inp), 0.3),
        g1=1.0 + nrm(ks[1], (hidden_dim,), 0.1),
        beta1=nrm(ks[2], (hidden_dim,), 0.1),
        m1=nrm(ks[3], (hidden_dim,), 0.1),
        v1=1.0 + 0.2 * jax.random.uniform(ks[4], (hidden_dim,), jnp.float32),
        wdw=nrm(ks[5], (hidden_dim, kernel_size, kernel_size), 0.3),
        g2=1.0 + nrm(ks[6], (hidden_dim,), 0.1),
        beta2=nrm(ks[7], (hidden_dim,), 0.1),
        m2=nrm(ks[8], (hidden_dim,), 0.1),
        v2=1.0 + 0.2 * jax.random.uniform(ks[9], (hidden_dim,), jnp.float32),
        wr=nrm(ks[10], (reduced, hidden_dim), 0.3),
        br=nrm(ks[11], (reduced,), 0.1),
        we=nrm(ks[12], (hidden_dim, reduced), 0.3),
        be=nrm(ks[13], (hidden_dim,), 0.1),
        w3=nrm(ks[14], (oup, hidden_dim), 0.3),
        g3=1.0 + nrm(ks[15], (oup,), 0.1),
        beta3=nrm(ks[16], (oup,), 0.1),
        m3=nrm(ks[17], (oup,), 0.1),
        v3=1.0 + 0.2 * jax.random.uniform(ks[18], (oup,), jnp.float32),
    )

    def fold(g, b, m, v):
        s = g / jnp.sqrt(v + eps)
        return s, b - m * s

    s1, b1 = fold(raw["g1"], raw["beta1"], raw["m1"], raw["v1"])
    s2, b2 = fold(raw["g2"], raw["beta2"], raw["m2"], raw["v2"])
    s3, b3 = fold(raw["g3"], raw["beta3"], raw["m3"], raw["v3"])
    kparams = dict(
        w1=raw["w1"], wdw=raw["wdw"],
        wr=raw["wr"], br=raw["br"], we=raw["we"], be=raw["be"], w3=raw["w3"],
        s1=s1, b1=b1, s2=s2, b2=b2, s3=s3, b3=b3,
    )
    return raw, kparams


def reference(x, raw, kernel_size, eps=1e-5):
    """Plain-JAX NCHW reference of InvertedResidual (inference-mode BN)."""
    P = (kernel_size - 1) // 2
    hp = lax.Precision.HIGHEST

    def bn(v, g, b, m, var):
        return (v - m[None, :, None, None]) / jnp.sqrt(var[None, :, None, None] + eps) \
            * g[None, :, None, None] + b[None, :, None, None]

    def hsig(v):
        return jnp.clip(v + 3.0, 0.0, 6.0) / 6.0

    h = jnp.einsum("oc,nchw->nohw", raw["w1"], x, precision=hp)
    h = bn(h, raw["g1"], raw["beta1"], raw["m1"], raw["v1"])
    h = h * hsig(h)
    d = lax.conv_general_dilated(
        h, raw["wdw"][:, None, :, :], window_strides=(1, 1),
        padding=((P, P), (P, P)), dimension_numbers=("NCHW", "OIHW", "NCHW"),
        feature_group_count=h.shape[1], precision=hp)
    d = bn(d, raw["g2"], raw["beta2"], raw["m2"], raw["v2"])
    pooled = jnp.mean(d, axis=(2, 3), keepdims=True)
    r = jnp.einsum("oc,nchw->nohw", raw["wr"], pooled, precision=hp) \
        + raw["br"][None, :, None, None]
    r = jnp.maximum(r, 0.0)
    e = jnp.einsum("oc,nchw->nohw", raw["we"], r, precision=hp) \
        + raw["be"][None, :, None, None]
    d = d * hsig(e)
    d = d * hsig(d)
    y = jnp.einsum("oc,nchw->nohw", raw["w3"], d, precision=hp)
    y = bn(y, raw["g3"], raw["beta3"], raw["m3"], raw["v3"])
    return x + y


if __name__ == "__main__":
    inp, hidden_dim, oup = 8, 16, 8
    kernel_size = 3
    N, H, W = 2, 16, 16

    key = jax.random.PRNGKey(0)
    kx, kp = jax.random.split(key)
    x = jax.random.normal(kx, (N, inp, H, W), jnp.float32)
    raw, kparams = init_params(kp, inp, hidden_dim, oup, kernel_size)

    out = inverted_residual(x, kparams, kernel_size)
    out = jax.block_until_ready(out)

    ref = reference(x, raw, kernel_size)
    assert out.shape == ref.shape == (N, oup, H, W)
    max_err = float(jnp.max(jnp.abs(out - ref)))
    if not bool(jnp.allclose(out, ref, rtol=5e-2, atol=5e-2)):
        raise AssertionError(f"kernel mismatch vs reference, max abs err = {max_err}")
    print("KERNEL_OK")
</pallas_src>

<mosaic_0001>
module attributes {stable_mosaic.version = 11 : i64} {
  func.func @_inverted_residual_kernel(%arg0: i32, %arg1: memref<1x8x256xf32, #tpu.memory_space<vmem>>, %arg2: memref<16x8xf32, #tpu.memory_space<vmem>>, %arg3: memref<16x9xf32, #tpu.memory_space<vmem>>, %arg4: memref<8x16xf32, #tpu.memory_space<vmem>>, %arg5: memref<16x8xf32, #tpu.memory_space<vmem>>, %arg6: memref<8x16xf32, #tpu.memory_space<vmem>>, %arg7: memref<2x256xi32, #tpu.memory_space<vmem>>, %arg8: memref<16x8xf32, #tpu.memory_space<vmem>>, %arg9: memref<1x8x256xf32, #tpu.memory_space<vmem>>) attributes {dimension_semantics = [#tpu.dimension_semantics<parallel>], iteration_bounds = array<i64: 2>, scalar_prefetch = 0 : i64, scratch_operands = 0 : i64, tpu.core_type = #tpu.core_type<tc>, window_params = [{transform_indices = @transform_0, window_bounds = array<i64: 1, 8, 256>}, {pipeline_mode = #tpu.pipeline_mode<synchronous>, transform_indices = @transform_1, window_bounds = array<i64: 16, 8>}, {pipeline_mode = #tpu.pipeline_mode<synchronous>, transform_indices = @transform_2, window_bounds = array<i64: 16, 9>}, {pipeline_mode = #tpu.pipeline_mode<synchronous>, transform_indices = @transform_3, window_bounds = array<i64: 8, 16>}, {pipeline_mode = #tpu.pipeline_mode<synchronous>, transform_indices = @transform_4, window_bounds = array<i64: 16, 8>}, {pipeline_mode = #tpu.pipeline_mode<synchronous>, transform_indices = @transform_5, window_bounds = array<i64: 8, 16>}, {pipeline_mode = #tpu.pipeline_mode<synchronous>, transform_indices = @transform_6, window_bounds = array<i64: 2, 256>}, {pipeline_mode = #tpu.pipeline_mode<synchronous>, transform_indices = @transform_7, window_bounds = array<i64: 16, 8>}, {transform_indices = @transform_8, window_bounds = array<i64: 1, 8, 256>}]} {
    %c0 = arith.constant 0 : index
    %c0_0 = arith.constant 0 : index
    %0 = vector.load %arg8[%c0, %c0_0] : memref<16x8xf32, #tpu.memory_space<vmem>>, vector<16x8xf32>
    %1 = vector.extract_strided_slice %0 {offsets = [0, 0], sizes = [16, 1], strides = [1, 1]} : vector<16x8xf32> to vector<16x1xf32>
    %2 = vector.extract_strided_slice %0 {offsets = [0, 1], sizes = [16, 1], strides = [1, 1]} : vector<16x8xf32> to vector<16x1xf32>
    %3 = vector.extract_strided_slice %0 {offsets = [0, 2], sizes = [16, 1], strides = [1, 1]} : vector<16x8xf32> to vector<16x1xf32>
    %4 = vector.extract_strided_slice %0 {offsets = [0, 3], sizes = [16, 1], strides = [1, 1]} : vector<16x8xf32> to vector<16x1xf32>
    %5 = vector.extract_strided_slice %0 {offsets = [0, 4], sizes = [16, 1], strides = [1, 1]} : vector<16x8xf32> to vector<16x1xf32>
    %6 = vector.extract_strided_slice %0 {offsets = [0, 5], sizes = [8, 1], strides = [1, 1]} : vector<16x8xf32> to vector<8x1xf32>
    %7 = vector.extract_strided_slice %0 {offsets = [0, 6], sizes = [8, 1], strides = [1, 1]} : vector<16x8xf32> to vector<8x1xf32>
    %8 = vector.extract_strided_slice %0 {offsets = [0, 7], sizes = [8, 1], strides = [1, 1]} : vector<16x8xf32> to vector<8x1xf32>
    %c0_1 = arith.constant 0 : index
    %c0_2 = arith.constant 0 : index
    %9 = vector.load %arg7[%c0_1, %c0_2] : memref<2x256xi32, #tpu.memory_space<vmem>>, vector<2x256xi32>
    %10 = vector.extract_strided_slice %9 {offsets = [0, 0], sizes = [1, 256], strides = [1, 1]} : vector<2x256xi32> to vector<1x256xi32>
    %11 = vector.extract_strided_slice %9 {offsets = [1, 0], sizes = [1, 256], strides = [1, 1]} : vector<2x256xi32> to vector<1x256xi32>
    %c0_3 = arith.constant 0 : index
    %c0_4 = arith.constant 0 : index
    %c0_5 = arith.constant 0 : index
    %12 = vector.load %arg1[%c0_3, %c0_4, %c0_5] : memref<1x8x256xf32, #tpu.memory_space<vmem>>, vector<1x8x256xf32>
    %13 = vector.shape_cast %12 : vector<1x8x256xf32> to vector<8x256xf32>
    %c0_6 = arith.constant 0 : index
    %c0_7 = arith.constant 0 : index
    %14 = vector.load %arg2[%c0_6, %c0_7] : memref<16x8xf32, #tpu.memory_space<vmem>>, vector<16x8xf32>
    %cst = arith.constant dense<0.000000e+00> : vector<16x256xf32>
    %15 = tpu.matmul %14, %13, %cst {dimension_numbers = #tpu.dot_dimension_numbers<[1], [0], [0], [1], [0, 0, 1, 1], [], []>} : vector<16x8xf32>, vector<8x256xf32>, vector<16x256xf32> -> vector<16x256xf32>
    %16 = vector.broadcast %1 : vector<16x1xf32> to vector<16x256xf32>
    %17 = arith.mulf %15, %16 : vector<16x256xf32>
    %18 = vector.broadcast %2 : vector<16x1xf32> to vector<16x256xf32>
    %19 = arith.addf %17, %18 : vector<16x256xf32>
    %cst_8 = arith.constant 3.000000e+00 : f32
    %20 = vector.broadcast %cst_8 : f32 to vector<16x256xf32>
    %21 = arith.addf %19, %20 : vector<16x256xf32>
    %cst_9 = arith.constant 0.000000e+00 : f32
    %cst_10 = arith.constant 6.000000e+00 : f32
    %22 = vector.broadcast %cst_9 : f32 to vector<16x256xf32>
    %23 = arith.maximumf %22, %21 : vector<16x256xf32>
    %24 = vector.broadcast %cst_10 : f32 to vector<16x256xf32>
    %25 = arith.minimumf %24, %23 : vector<16x256xf32>
    %cst_11 = arith.constant 0.166666672 : f32
    %26 = vector.broadcast %cst_11 : f32 to vector<16x256xf32>
    %27 = arith.mulf %25, %26 : vector<16x256xf32>
    %28 = arith.mulf %19, %27 : vector<16x256xf32>
    %c0_12 = arith.constant 0 : index
    %c0_13 = arith.constant 0 : index
    %29 = vector.load %arg3[%c0_12, %c0_13] : memref<16x9xf32, #tpu.memory_space<vmem>>, vector<16x9xf32>
    %30 = vector.extract_strided_slice %29 {offsets = [0, 4], sizes = [16, 1], strides = [1, 1]} : vector<16x9xf32> to vector<16x1xf32>
    %31 = vector.broadcast %30 : vector<16x1xf32> to vector<16x256xf32>
    %32 = arith.mulf %28, %31 : vector<16x256xf32>
    %c17_i32 = arith.constant 17 : i32
    %33 = tpu.dynamic_rotate %28 by %c17_i32 dim 1 : vector<16x256xf32>, i32 -> vector<16x256xf32>
    %c1_i32 = arith.constant 1 : i32
    %34 = vector.broadcast %c1_i32 : i32 to vector<1x256xi32>
    %35 = arith.cmpi sge, %11, %34 : vector<1x256xi32>
    %c1_i32_14 = arith.constant 1 : i32
    %36 = vector.broadcast %c1_i32_14 : i32 to vector<1x256xi32>
    %37 = arith.cmpi sge, %10, %36 : vector<1x256xi32>
    %38 = arith.andi %35, %37 : vector<1x256xi1>
    %cst_15 = arith.constant 0.000000e+00 : f32
    %39 = vector.shape_cast %38 : vector<1x256xi1> to vector<1x256xi1>
    %40 = vector.broadcast %39 : vector<1x256xi1> to vector<16x256xi1>
    %41 = vector.broadcast %cst_15 : f32 to vector<16x256xf32>
    %42 = arith.select %40, %33, %41 : vector<16x256xi1>, vector<16x256xf32>
    %43 = vector.extract_strided_slice %29 {offsets = [0, 0], sizes = [16, 1], strides = [1, 1]} : vector<16x9xf32> to vector<16x1xf32>
    %44 = vector.broadcast %43 : vector<16x1xf32> to vector<16x256xf32>
    %45 = arith.mulf %42, %44 : vector<16x256xf32>
    %46 = arith.addf %32, %45 : vector<16x256xf32>
    %c16_i32 = arith.constant 16 : i32
    %47 = tpu.dynamic_rotate %28 by %c16_i32 dim 1 : vector<16x256xf32>, i32 -> vector<16x256xf32>
    %c1_i32_16 = arith.constant 1 : i32
    %48 = vector.broadcast %c1_i32_16 : i32 to vector<1x256xi32>
    %49 = arith.cmpi sge, %11, %48 : vector<1x256xi32>
    %cst_17 = arith.constant 0.000000e+00 : f32
    %50 = vector.shape_cast %49 : vector<1x256xi1> to vector<1x256xi1>
    %51 = vector.broadcast %50 : vector<1x256xi1> to vector<16x256xi1>
    %52 = vector.broadcast %cst_17 : f32 to vector<16x256xf32>
    %53 = arith.select %51, %47, %52 : vector<16x256xi1>, vector<16x256xf32>
    %54 = vector.extract_strided_slice %29 {offsets = [0, 1], sizes = [16, 1], strides = [1, 1]} : vector<16x9xf32> to vector<16x1xf32>
    %55 = vector.broadcast %54 : vector<16x1xf32> to vector<16x256xf32>
    %56 = arith.mulf %53, %55 : vector<16x256xf32>
    %57 = arith.addf %46, %56 : vector<16x256xf32>
    %c15_i32 = arith.constant 15 : i32
    %58 = tpu.dynamic_rotate %28 by %c15_i32 dim 1 : vector<16x256xf32>, i32 -> vector<16x256xf32>
    %c1_i32_18 = arith.constant 1 : i32
    %59 = vector.broadcast %c1_i32_18 : i32 to vector<1x256xi32>
    %60 = arith.cmpi sge, %11, %59 : vector<1x256xi32>
    %c15_i32_19 = arith.constant 15 : i32
    %61 = vector.broadcast %c15_i32_19 : i32 to vector<1x256xi32>
    %62 = arith.cmpi slt, %10, %61 : vector<1x256xi32>
    %63 = arith.andi %60, %62 : vector<1x256xi1>
    %cst_20 = arith.constant 0.000000e+00 : f32
    %64 = vector.shape_cast %63 : vector<1x256xi1> to vector<1x256xi1>
    %65 = vector.broadcast %64 : vector<1x256xi1> to vector<16x256xi1>
    %66 = vector.broadcast %cst_20 : f32 to vector<16x256xf32>
    %67 = arith.select %65, %58, %66 : vector<16x256xi1>, vector<16x256xf32>
    %68 = vector.extract_strided_slice %29 {offsets = [0, 2], sizes = [16, 1], strides = [1, 1]} : vector<16x9xf32> to vector<16x1xf32>
    %69 = vector.broadcast %68 : vector<16x1xf32> to vector<16x256xf32>
    %70 = arith.mulf %67, %69 : vector<16x256xf32>
    %71 = arith.addf %57, %70 : vector<16x256xf32>
    %c1_i32_21 = arith.constant 1 : i32
    %72 = tpu.dynamic_rotate %28 by %c1_i32_21 dim 1 : vector<16x256xf32>, i32 -> vector<16x256xf32>
    %c1_i32_22 = arith.constant 1 : i32
    %73 = vector.broadcast %c1_i32_22 : i32 to vector<1x256xi32>
    %74 = arith.cmpi sge, %10, %73 : vector<1x256xi32>
    %cst_23 = arith.constant 0.000000e+00 : f32
    %75 = vector.shape_cast %74 : vector<1x256xi1> to vector<1x256xi1>
    %76 = vector.broadcast %75 : vector<1x256xi1> to vector<16x256xi1>
    %77 = vector.broadcast %cst_23 : f32 to vector<16x256xf32>
    %78 = arith.select %76, %72, %77 : vector<16x256xi1>, vector<16x256xf32>
    %79 = vector.extract_strided_slice %29 {offsets = [0, 3], sizes = [16, 1], strides = [1, 1]} : vector<16x9xf32> to vector<16x1xf32>
    %80 = vector.broadcast %79 : vector<16x1xf32> to vector<16x256xf32>
    %81 = arith.mulf %78, %80 : vector<16x256xf32>
    %82 = arith.addf %71, %81 : vector<16x256xf32>
    %c255_i32 = arith.constant 255 : i32
    %83 = tpu.dynamic_rotate %28 by %c255_i32 dim 1 : vector<16x256xf32>, i32 -> vector<16x256xf32>
    %c15_i32_24 = arith.constant 15 : i32
    %84 = vector.broadcast %c15_i32_24 : i32 to vector<1x256xi32>
    %85 = arith.cmpi slt, %10, %84 : vector<1x256xi32>
    %cst_25 = arith.constant 0.000000e+00 : f32
    %86 = vector.shape_cast %85 : vector<1x256xi1> to vector<1x256xi1>
    %87 = vector.broadcast %86 : vector<1x256xi1> to vector<16x256xi1>
    %88 = vector.broadcast %cst_25 : f32 to vector<16x256xf32>
    %89 = arith.select %87, %83, %88 : vector<16x256xi1>, vector<16x256xf32>
    %90 = vector.extract_strided_slice %29 {offsets = [0, 5], sizes = [16, 1], strides = [1, 1]} : vector<16x9xf32> to vector<16x1xf32>
    %91 = vector.broadcast %90 : vector<16x1xf32> to vector<16x256xf32>
    %92 = arith.mulf %89, %91 : vector<16x256xf32>
    %93 = arith.addf %82, %92 : vector<16x256xf32>
    %c241_i32 = arith.constant 241 : i32
    %94 = tpu.dynamic_rotate %28 by %c241_i32 dim 1 : vector<16x256xf32>, i32 -> vector<16x256xf32>
    %c15_i32_26 = arith.constant 15 : i32
    %95 = vector.broadcast %c15_i32_26 : i32 to vector<1x256xi32>
    %96 = arith.cmpi slt, %11, %95 : vector<1x256xi32>
    %c1_i32_27 = arith.constant 1 : i32
    %97 = vector.broadcast %c1_i32_27 : i32 to vector<1x256xi32>
    %98 = arith.cmpi sge, %10, %97 : vector<1x256xi32>
    %99 = arith.andi %96, %98 : vector<1x256xi1>
    %cst_28 = arith.constant 0.000000e+00 : f32
    %100 = vector.shape_cast %99 : vector<1x256xi1> to vector<1x256xi1>
    %101 = vector.broadcast %100 : vector<1x256xi1> to vector<16x256xi1>
    %102 = vector.broadcast %cst_28 : f32 to vector<16x256xf32>
    %103 = arith.select %101, %94, %102 : vector<16x256xi1>, vector<16x256xf32>
    %104 = vector.extract_strided_slice %29 {offsets = [0, 6], sizes = [16, 1], strides = [1, 1]} : vector<16x9xf32> to vector<16x1xf32>
    %105 = vector.broadcast %104 : vector<16x1xf32> to vector<16x256xf32>
    %106 = arith.mulf %103, %105 : vector<16x256xf32>
    %107 = arith.addf %93, %106 : vector<16x256xf32>
    %c240_i32 = arith.constant 240 : i32
    %108 = tpu.dynamic_rotate %28 by %c240_i32 dim 1 : vector<16x256xf32>, i32 -> vector<16x256xf32>
    %c15_i32_29 = arith.constant 15 : i32
    %109 = vector.broadcast %c15_i32_29 : i32 to vector<1x256xi32>
    %110 = arith.cmpi slt, %11, %109 : vector<1x256xi32>
    %cst_30 = arith.constant 0.000000e+00 : f32
    %111 = vector.shape_cast %110 : vector<1x256xi1> to vector<1x256xi1>
    %112 = vector.broadcast %111 : vector<1x256xi1> to vector<16x256xi1>
    %113 = vector.broadcast %cst_30 : f32 to vector<16x256xf32>
    %114 = arith.select %112, %108, %113 : vector<16x256xi1>, vector<16x256xf32>
    %115 = vector.extract_strided_slice %29 {offsets = [0, 7], sizes = [16, 1], strides = [1, 1]} : vector<16x9xf32> to vector<16x1xf32>
    %116 = vector.broadcast %115 : vector<16x1xf32> to vector<16x256xf32>
    %117 = arith.mulf %114, %116 : vector<16x256xf32>
    %118 = arith.addf %107, %117 : vector<16x256xf32>
    %c239_i32 = arith.constant 239 : i32
    %119 = tpu.dynamic_rotate %28 by %c239_i32 dim 1 : vector<16x256xf32>, i32 -> vector<16x256xf32>
    %c15_i32_31 = arith.constant 15 : i32
    %120 = vector.broadcast %c15_i32_31 : i32 to vector<1x256xi32>
    %121 = arith.cmpi slt, %11, %120 : vector<1x256xi32>
    %c15_i32_32 = arith.constant 15 : i32
    %122 = vector.broadcast %c15_i32_32 : i32 to vector<1x256xi32>
    %123 = arith.cmpi slt, %10, %122 : vector<1x256xi32>
    %124 = arith.andi %121, %123 : vector<1x256xi1>
    %cst_33 = arith.constant 0.000000e+00 : f32
    %125 = vector.shape_cast %124 : vector<1x256xi1> to vector<1x256xi1>
    %126 = vector.broadcast %125 : vector<1x256xi1> to vector<16x256xi1>
    %127 = vector.broadcast %cst_33 : f32 to vector<16x256xf32>
    %128 = arith.select %126, %119, %127 : vector<16x256xi1>, vector<16x256xf32>
    %129 = vector.extract_strided_slice %29 {offsets = [0, 8], sizes = [16, 1], strides = [1, 1]} : vector<16x9xf32> to vector<16x1xf32>
    %130 = vector.broadcast %129 : vector<16x1xf32> to vector<16x256xf32>
    %131 = arith.mulf %128, %130 : vector<16x256xf32>
    %132 = arith.addf %118, %131 : vector<16x256xf32>
    %133 = vector.broadcast %3 : vector<16x1xf32> to vector<16x256xf32>
    %134 = arith.mulf %132, %133 : vector<16x256xf32>
    %135 = vector.broadcast %4 : vector<16x1xf32> to vector<16x256xf32>
    %136 = arith.addf %134, %135 : vector<16x256xf32>
    %cst_34 = arith.constant dense<0.000000e+00> : vector<16xf32>
    %137 = vector.multi_reduction <add>, %132, %cst_34 [1] : vector<16x256xf32> to vector<16xf32>
    %138 = vector.shape_cast %137 : vector<16xf32> to vector<16x1xf32>
    %cst_35 = arith.constant 3.906250e-03 : f32
    %139 = vector.broadcast %cst_35 : f32 to vector<16x1xf32>
    %140 = arith.mulf %138, %139 : vector<16x1xf32>
    %141 = arith.mulf %140, %3 : vector<16x1xf32>
    %142 = arith.addf %141, %4 : vector<16x1xf32>
    %c0_36 = arith.constant 0 : index
    %c0_37 = arith.constant 0 : index
    %143 = vector.load %arg4[%c0_36, %c0_37] : memref<8x16xf32, #tpu.memory_space<vmem>>, vector<8x16xf32>
    %cst_38 = arith.constant dense<0.000000e+00> : vector<8x1xf32>
    %144 = tpu.matmul %143, %142, %cst_38 {dimension_numbers = #tpu.dot_dimension_numbers<[1], [0], [0], [1], [0, 0, 1, 1], [], []>} : vector<8x16xf32>, vector<16x1xf32>, vector<8x1xf32> -> vector<8x1xf32>
    %145 = arith.addf %144, %6 : vector<8x1xf32>
    %cst_39 = arith.constant 0.000000e+00 : f32
    %146 = vector.broadcast %cst_39 : f32 to vector<8x1xf32>
    %147 = arith.maximumf %145, %146 : vector<8x1xf32>
    %c0_40 = arith.constant 0 : index
    %c0_41 = arith.constant 0 : index
    %148 = vector.load %arg5[%c0_40, %c0_41] : memref<16x8xf32, #tpu.memory_space<vmem>>, vector<16x8xf32>
    %cst_42 = arith.constant dense<0.000000e+00> : vector<16x1xf32>
    %149 = tpu.matmul %148, %147, %cst_42 {dimension_numbers = #tpu.dot_dimension_numbers<[1], [0], [0], [1], [0, 0, 1, 1], [], []>} : vector<16x8xf32>, vector<8x1xf32>, vector<16x1xf32> -> vector<16x1xf32>
    %150 = arith.addf %149, %5 : vector<16x1xf32>
    %cst_43 = arith.constant 3.000000e+00 : f32
    %151 = vector.broadcast %cst_43 : f32 to vector<16x1xf32>
    %152 = arith.addf %150, %151 : vector<16x1xf32>
    %cst_44 = arith.constant 0.000000e+00 : f32
    %cst_45 = arith.constant 6.000000e+00 : f32
    %153 = vector.broadcast %cst_44 : f32 to vector<16x1xf32>
    %154 = arith.maximumf %153, %152 : vector<16x1xf32>
    %155 = vector.broadcast %cst_45 : f32 to vector<16x1xf32>
    %156 = arith.minimumf %155, %154 : vector<16x1xf32>
    %cst_46 = arith.constant 0.166666672 : f32
    %157 = vector.broadcast %cst_46 : f32 to vector<16x1xf32>
    %158 = arith.mulf %156, %157 : vector<16x1xf32>
    %159 = vector.broadcast %158 : vector<16x1xf32> to vector<16x256xf32>
    %160 = arith.mulf %136, %159 : vector<16x256xf32>
    %cst_47 = arith.constant 3.000000e+00 : f32
    %161 = vector.broadcast %cst_47 : f32 to vector<16x256xf32>
    %162 = arith.addf %160, %161 : vector<16x256xf32>
    %cst_48 = arith.constant 0.000000e+00 : f32
    %cst_49 = arith.constant 6.000000e+00 : f32
    %163 = vector.broadcast %cst_48 : f32 to vector<16x256xf32>
    %164 = arith.maximumf %163, %162 : vector<16x256xf32>
    %165 = vector.broadcast %cst_49 : f32 to vector<16x256xf32>
    %166 = arith.minimumf %165, %164 : vector<16x256xf32>
    %cst_50 = arith.constant 0.166666672 : f32
    %167 = vector.broadcast %cst_50 : f32 to vector<16x256xf32>
    %168 = arith.mulf %166, %167 : vector<16x256xf32>
    %169 = arith.mulf %160, %168 : vector<16x256xf32>
    %c0_51 = arith.constant 0 : index
    %c0_52 = arith.constant 0 : index
    %170 = vector.load %arg6[%c0_51, %c0_52] : memref<8x16xf32, #tpu.memory_space<vmem>>, vector<8x16xf32>
    %cst_53 = arith.constant dense<0.000000e+00> : vector<8x256xf32>
    %171 = tpu.matmul %170, %169, %cst_53 {dimension_numbers = #tpu.dot_dimension_numbers<[1], [0], [0], [1], [0, 0, 1, 1], [], []>} : vector<8x16xf32>, vector<16x256xf32>, vector<8x256xf32> -> vector<8x256xf32>
    %172 = vector.broadcast %7 : vector<8x1xf32> to vector<8x256xf32>
    %173 = arith.mulf %171, %172 : vector<8x256xf32>
    %174 = vector.broadcast %8 : vector<8x1xf32> to vector<8x256xf32>
    %175 = arith.addf %173, %174 : vector<8x256xf32>
    %176 = arith.addf %175, %13 : vector<8x256xf32>
    %177 = vector.shape_cast %176 : vector<8x256xf32> to vector<1x8x256xf32>
    %c0_54 = arith.constant 0 : index
    %c0_55 = arith.constant 0 : index
    %c0_56 = arith.constant 0 : index
    %178 = vector.load %arg9[%c0_54, %c0_55, %c0_56] : memref<1x8x256xf32, #tpu.memory_space<vmem>>, vector<1x8x256xf32>
    tpu.vector_store %arg9[%c0_54, %c0_55, %c0_56], %177 {strides = array<i32>} : memref<1x8x256xf32, #tpu.memory_space<vmem>>, vector<1x8x256xf32>,
    return
  }
  func.func @transform_0(%arg0: i32) -> (i32, i32, i32) {
    %c0_i32 = arith.constant 0 : i32
    %c0_i32_0 = arith.constant 0 : i32
    %c0_i32_1 = arith.constant 0 : i32
    return %arg0, %c0_i32, %c0_i32_0 : i32, i32, i32
  }
  func.func @transform_1(%arg0: i32) -> (i32, i32) {
    %c0_i32 = arith.constant 0 : i32
    %c0_i32_0 = arith.constant 0 : i32
    %c0_i32_1 = arith.constant 0 : i32
    return %c0_i32, %c0_i32_0 : i32, i32
  }
  func.func @transform_2(%arg0: i32) -> (i32, i32) {
    %c0_i32 = arith.constant 0 : i32
    %c0_i32_0 = arith.constant 0 : i32
    %c0_i32_1 = arith.constant 0 : i32
    return %c0_i32, %c0_i32_0 : i32, i32
  }
  func.func @transform_3(%arg0: i32) -> (i32, i32) {
    %c0_i32 = arith.constant 0 : i32
    %c0_i32_0 = arith.constant 0 : i32
    %c0_i32_1 = arith.constant 0 : i32
    return %c0_i32, %c0_i32_0 : i32, i32
  }
  func.func @transform_4(%arg0: i32) -> (i32, i32) {
    %c0_i32 = arith.constant 0 : i32
    %c0_i32_0 = arith.constant 0 : i32
    %c0_i32_1 = arith.constant 0 : i32
    return %c0_i32, %c0_i32_0 : i32, i32
  }
  func.func @transform_5(%arg0: i32) -> (i32, i32) {
    %c0_i32 = arith.constant 0 : i32
    %c0_i32_0 = arith.constant 0 : i32
    %c0_i32_1 = arith.constant 0 : i32
    return %c0_i32, %c0_i32_0 : i32, i32
  }
  func.func @transform_6(%arg0: i32) -> (i32, i32) {
    %c0_i32 = arith.constant 0 : i32
    %c0_i32_0 = arith.constant 0 : i32
    %c0_i32_1 = arith.constant 0 : i32
    return %c0_i32, %c0_i32_0 : i32, i32
  }
  func.func @transform_7(%arg0: i32) -> (i32, i32) {
    %c0_i32 = arith.constant 0 : i32
    %c0_i32_0 = arith.constant 0 : i32
    %c0_i32_1 = arith.constant 0 : i32
    return %c0_i32, %c0_i32_0 : i32, i32
  }
  func.func @transform_8(%arg0: i32) -> (i32, i32, i32) {
    %c0_i32 = arith.constant 0 : i32
    %c0_i32_0 = arith.constant 0 : i32
    %c0_i32_1 = arith.constant 0 : i32
    return %arg0, %c0_i32, %c0_i32_0 : i32, i32, i32
  }
}

</mosaic_0001>

<llo_original>
// kernel: tpu_custom_call.1
$region0: #{tpu_custom_call.1}
  #allocation0 [shape = 'u32[]', space=smem, size = 0x4, offset = 0x4, fixed_abs, tag = 'smem constant byte address 0x4 - core index']
  #allocation1 [shape = 'u32[144,128]{1,0:T(1,128)}', space=vmem, size = 0x12000, scoped, tag = 'internal scratch']
  %s0 = inlined_call_operand.vmem [shape: f32[2,8,256], index: 0, kind: input, shape index: {}]
  %s1 = inlined_call_operand.vmem [shape: f32[16,8], index: 1, kind: input, shape index: {}]
  %s2 = inlined_call_operand.vmem [shape: f32[16,9], index: 2, kind: input, shape index: {}]
  %s3 = inlined_call_operand.vmem [shape: f32[8,16], index: 3, kind: input, shape index: {}]
  %s4 = inlined_call_operand.vmem [shape: f32[16,8], index: 4, kind: input, shape index: {}]
  %s5 = inlined_call_operand.vmem [shape: f32[8,16], index: 5, kind: input, shape index: {}]
  %s6 = inlined_call_operand.hbm [shape: s32[2,256], index: 6, kind: input, shape index: {}]
  %s7 = inlined_call_operand.vmem [shape: f32[16,8], index: 7, kind: input, shape index: {}]
  %s8 = inlined_call_operand.hbm [shape: f32[2,8,256], index: 8, kind: output, shape index: {}]
  %s9 = sld [smem:[#allocation0]]
  $region69: #{tpu_custom_call.1} parent=0
    _
  %s11 = ssub.s32 1, %s9
  %s12 = scalar_select 0, %s11, %s9
  $region1: #{tpu_custom_call.1} parent=0
    #allocation2 [shape = 'u8[2048]{0}', space=vmem, size = 0x800, scoped, tag = 'input window, operand 6, single buffered']
    #allocation3 [shape = 's32[2]{0}', space=sflag, size = 0x8, scoped, tag = 'scoped memory for tpu_custom_call.1']
    #allocation4 [shape = 's32[2]{0}', space=sflag, size = 0x8, scoped, tag = 'scoped memory for tpu_custom_call.1']
    #allocation5 [shape = 'u8[16384]{0}', space=vmem, size = 0x4000, scoped, tag = 'output window, operand 0']
    %13 = vsyncpa [#allocation3], 0
    %14 = vsyncpa [#allocation4], 0
    %s15 = scalar_lea.sflag [#allocation4], 1
    %16 = vsyncpa %s15, 0
    loop: start=0, step=1, limit=4
    $region2: #{tpu_custom_call.1} parent=1 // loop_pre_header
      _
    $region3: #{tpu_custom_call.1} parent=1 // loop_header
      %s18 = sphi 0, %s22
      %p19 = scmp.ge.s32.totalorder %s18, 4
      %s28 = sphi 0, %s30
      %s31 = sphi 0, %s28
      %s32 = sphi 0, %s31
      %s48 = sphi 0, %s32
      %s52 = sphi 0, %s52
      %s54 = sphi 0, %s52
      %s55 = sphi 0, %s54
      %s69 = sphi 0, %s55
      %s73 = sphi 0, %s73
      %s75 = sphi 0, %s73
      %s76 = sphi 0, %s75
      %s90 = sphi 0, %s76
      %s94 = sphi 0, %s94
      %s96 = sphi 0, %s94
      %s97 = sphi 0, %s96
      %s111 = sphi 0, %s97
      %s115 = sphi 0, %s115
      %s117 = sphi 0, %s115
      %s118 = sphi 0, %s117
      %s132 = sphi 0, %s118
      %s136 = sphi 0, %s136
      %s138 = sphi 0, %s136
      %s139 = sphi 0, %s138
      %s153 = sphi 0, %s139
      %s157 = sphi 0, %s157
      %s159 = sphi 0, %s157
      %s160 = sphi 0, %s159
      %s174 = sphi 0, %s160
      %s178 = sphi 0, %s178
      %s180 = sphi 0, %s178
      %s181 = sphi 0, %s180
      %s195 = sphi 0, %s181
      %s201 = sphi 0, %s203
      %s204 = sphi 0, %s201
      %s205 = sphi 0, %s204
      %s221 = sphi 0, %s205
    $region4: #{tpu_custom_call.1} parent=1 // loop_header_branch
      %21 = sbr.rel (%p19) target = $region8
    $region5: #{tpu_custom_call.1} parent=1 // loop_body
      %s23 = ssub.s32 %s18, 1
      %s24 = ssub.s32 %s18, 2
      %s25 = sadd.s32 %s18, 1
      %s26 = ssub.s32 %s18, %s25
      %p27 = scmp.eq.s32.totalorder %s26, 0
      %s29 = sadd.s32 %s28, 1
      %s30 = scalar_select %p27, %s28, %s29
      %p33 = pneg %p27
      %p34 = scmp.eq.s32.totalorder %s18, 1
      %p35 = por %p33, %p34
      %p36 = scmp.ne.s32.totalorder %s28, %s31
      %p37 = scmp.eq.s32.totalorder %s18, 0
      %p38 = por %p36, %p37
      %p39 = scmp.ne.s32.totalorder %s28, %s31
      %p40 = scmp.eq.s32.totalorder %s23, 1
      %p41 = por %p39, %p40
      %p42 = scmp.ne.s32.totalorder %s31, %s32
      %p43 = scmp.eq.s32.totalorder %s23, 0
      %p44 = por %p42, %p43
      %p45 = scmp.ne.s32.totalorder %s31, %s32
      %p46 = scmp.eq.s32.totalorder %s24, 1
      %p47 = por %p45, %p46
      %p49 = scmp.ne.s32.totalorder %s32, %s48
      %p50 = scmp.eq.s32.totalorder %s24, 0
      %p51 = por %p49, %p50
      %s53 = sadd.s32 %s52, 1
      %p56 = scmp.eq.s32.totalorder %s18, 1
      %p57 = scmp.ne.s32.totalorder %s52, %s54
      %p58 = scmp.eq.s32.totalorder %s18, 0
      %p59 = por %p57, %p58
      %p60 = scmp.ne.s32.totalorder %s52, %s54
      %p61 = scmp.eq.s32.totalorder %s23, 1
      %p62 = por %p60, %p61
      %p63 = scmp.ne.s32.totalorder %s54, %s55
      %p64 = scmp.eq.s32.totalorder %s23, 0
      %p65 = por %p63, %p64
      %p66 = scmp.ne.s32.totalorder %s54, %s55
      %p67 = scmp.eq.s32.totalorder %s24, 1
      %p68 = por %p66, %p67
      %p70 = scmp.ne.s32.totalorder %s55, %s69
      %p71 = scmp.eq.s32.totalorder %s24, 0
      %p72 = por %p70, %p71
      %s74 = sadd.s32 %s73, 1
      %p77 = scmp.eq.s32.totalorder %s18, 1
      %p78 = scmp.ne.s32.totalorder %s73, %s75
      %p79 = scmp.eq.s32.totalorder %s18, 0
      %p80 = por %p78, %p79
      %p81 = scmp.ne.s32.totalorder %s73, %s75
      %p82 = scmp.eq.s32.totalorder %s23, 1
      %p83 = por %p81, %p82
      %p84 = scmp.ne.s32.totalorder %s75, %s76
      %p85 = scmp.eq.s32.totalorder %s23, 0
      %p86 = por %p84, %p85
      %p87 = scmp.ne.s32.totalorder %s75, %s76
      %p88 = scmp.eq.s32.totalorder %s24, 1
      %p89 = por %p87, %p88
      %p91 = scmp.ne.s32.totalorder %s76, %s90
      %p92 = scmp.eq.s32.totalorder %s24, 0
      %p93 = por %p91, %p92
      %s95 = sadd.s32 %s94, 1
      %p98 = scmp.eq.s32.totalorder %s18, 1
      %p99 = scmp.ne.s32.totalorder %s94, %s96
      %p100 = scmp.eq.s32.totalorder %s18, 0
      %p101 = por %p99, %p100
      %p102 = scmp.ne.s32.totalorder %s94, %s96
      %p103 = scmp.eq.s32.totalorder %s23, 1
      %p104 = por %p102, %p103
      %p105 = scmp.ne.s32.totalorder %s96, %s97
      %p106 = scmp.eq.s32.totalorder %s23, 0
      %p107 = por %p105, %p106
      %p108 = scmp.ne.s32.totalorder %s96, %s97
      %p109 = scmp.eq.s32.totalorder %s24, 1
      %p110 = por %p108, %p109
      %p112 = scmp.ne.s32.totalorder %s97, %s111
      %p113 = scmp.eq.s32.totalorder %s24, 0
      %p114 = por %p112, %p113
      %s116 = sadd.s32 %s115, 1
      %p119 = scmp.eq.s32.totalorder %s18, 1
      %p120 = scmp.ne.s32.totalorder %s115, %s117
      %p121 = scmp.eq.s32.totalorder %s18, 0
      %p122 = por %p120, %p121
      %p123 = scmp.ne.s32.totalorder %s115, %s117
      %p124 = scmp.eq.s32.totalorder %s23, 1
      %p125 = por %p123, %p124
      %p126 = scmp.ne.s32.totalorder %s117, %s118
      %p127 = scmp.eq.s32.totalorder %s23, 0
      %p128 = por %p126, %p127
      %p129 = scmp.ne.s32.totalorder %s117, %s118
      %p130 = scmp.eq.s32.totalorder %s24, 1
      %p131 = por %p129, %p130
      %p133 = scmp.ne.s32.totalorder %s118, %s132
      %p134 = scmp.eq.s32.totalorder %s24, 0
      %p135 = por %p133, %p134
      %s137 = sadd.s32 %s136, 1
      %p140 = scmp.eq.s32.totalorder %s18, 1
      %p141 = scmp.ne.s32.totalorder %s136, %s138
      %p142 = scmp.eq.s32.totalorder %s18, 0
      %p143 = por %p141, %p142
      %p144 = scmp.ne.s32.totalorder %s136, %s138
      %p145 = scmp.eq.s32.totalorder %s23, 1
      %p146 = por %p144, %p145
      %p147 = scmp.ne.s32.totalorder %s138, %s139
      %p148 = scmp.eq.s32.totalorder %s23, 0
      %p149 = por %p147, %p148
      %p150 = scmp.ne.s32.totalorder %s138, %s139
      %p151 = scmp.eq.s32.totalorder %s24, 1
      %p152 = por %p150, %p151
      %p154 = scmp.ne.s32.totalorder %s139, %s153
      %p155 = scmp.eq.s32.totalorder %s24, 0
      %p156 = por %p154, %p155
      %s158 = sadd.s32 %s157, 1
      %p161 = scmp.eq.s32.totalorder %s18, 1
      %p162 = scmp.ne.s32.totalorder %s157, %s159
      %p163 = scmp.eq.s32.totalorder %s18, 0
      %p164 = por %p162, %p163
      %p165 = scmp.ne.s32.totalorder %s157, %s159
      %p166 = scmp.eq.s32.totalorder %s23, 1
      %p167 = por %p165, %p166
      %p168 = scmp.ne.s32.totalorder %s159, %s160
      %p169 = scmp.eq.s32.totalorder %s23, 0
      %p170 = por %p168, %p169
      %p171 = scmp.ne.s32.totalorder %s159, %s160
      %p172 = scmp.eq.s32.totalorder %s24, 1
      %p173 = por %p171, %p172
      %p175 = scmp.ne.s32.totalorder %s160, %s174
      %p176 = scmp.eq.s32.totalorder %s24, 0
      %p177 = por %p175, %p176
      %s179 = sadd.s32 %s178, 1
      %p182 = scmp.eq.s32.totalorder %s18, 1
      %p183 = scmp.ne.s32.totalorder %s178, %s180
      %p184 = scmp.eq.s32.totalorder %s18, 0
      %p185 = por %p183, %p184
      %p186 = scmp.ne.s32.totalorder %s178, %s180
      %p187 = scmp.eq.s32.totalorder %s23, 1
      %p188 = por %p186, %p187
      %p189 = scmp.ne.s32.totalorder %s180, %s181
      %p190 = scmp.eq.s32.totalorder %s23, 0
      %p191 = por %p189, %p190
      %p192 = scmp.ne.s32.totalorder %s180, %s181
      %p193 = scmp.eq.s32.totalorder %s24, 1
      %p194 = por %p192, %p193
      %p196 = scmp.ne.s32.totalorder %s181, %s195
      %p197 = scmp.eq.s32.totalorder %s24, 0
      %p198 = por %p196, %p197
      %s199 = ssub.s32 %s18, %s25
      %p200 = scmp.eq.s32.totalorder %s199, 0
      %s202 = sadd.s32 %s201, 1
      %s203 = scalar_select %p200, %s201, %s202
      %p206 = pneg %p200
      %p207 = scmp.eq.s32.totalorder %s18, 1
      %p208 = por %p206, %p207
      %p209 = scmp.ne.s32.totalorder %s201, %s204
      %p210 = scmp.eq.s32.totalorder %s18, 0
      %p211 = por %p209, %p210
      %p212 = scmp.ne.s32.totalorder %s201, %s204
      %p213 = scmp.eq.s32.totalorder %s23, 1
      %p214 = por %p212, %p213
      %p215 = scmp.ne.s32.totalorder %s204, %s205
      %p216 = scmp.eq.s32.totalorder %s23, 0
      %p217 = por %p215, %p216
      %p218 = scmp.ne.s32.totalorder %s204, %s205
      %p219 = scmp.eq.s32.totalorder %s24, 1
      %p220 = por %p218, %p219
      %p222 = scmp.ne.s32.totalorder %s205, %s221
      %p223 = scmp.eq.s32.totalorder %s24, 0
      %p224 = por %p222, %p223
      %p225 = scmp.le.s32.totalorder 1, %s18
      %p226 = scmp.lt.s32.totalorder %s18, 3
      %p227 = pnand %p225, %p226
      %p228 = pneg %p227
      // Predicated region
      $region9: #{tpu_custom_call.1} parent=5 // pred_check
        _
      $region10: #{tpu_custom_call.1} parent=5 // pred_check_branch
        %230 = sbr.rel (%p227) target = $region12
      $region11: #{tpu_custom_call.1} parent=5 // pred_region
        %s231 = ssub.s32 %s18, 1
        // Predicated region
        $region13: #{tpu_custom_call.1} parent=11 // pred_check
          %p232 = pneg %p65
        $region14: #{tpu_custom_call.1} parent=11 // pred_check_branch
          %234 = sbr.rel (%p232) target = $region16
        $region15: #{tpu_custom_call.1} parent=11 // pred_region
          _
        $region16: #{tpu_custom_call.1} parent=11 // pred_fallthru
          _
        // Predicated region
        $region17: #{tpu_custom_call.1} parent=11 // pred_check
          %p235 = pneg %p86
        $region18: #{tpu_custom_call.1} parent=11 // pred_check_branch
          %237 = sbr.rel (%p235) target = $region20
        $region19: #{tpu_custom_call.1} parent=11 // pred_region
          _
        $region20: #{tpu_custom_call.1} parent=11 // pred_fallthru
          _
        // Predicated region
        $region21: #{tpu_custom_call.1} parent=11 // pred_check
          %p238 = pneg %p107
        $region22: #{tpu_custom_call.1} parent=11 // pred_check_branch
          %240 = sbr.rel (%p238) target = $region24
        $region23: #{tpu_custom_call.1} parent=11 // pred_region
          _
        $region24: #{tpu_custom_call.1} parent=11 // pred_fallthru
          _
        // Predicated region
        $region25: #{tpu_custom_call.1} parent=11 // pred_check
          %p241 = pneg %p128
        $region26: #{tpu_custom_call.1} parent=11 // pred_check_branch
          %243 = sbr.rel (%p241) target = $region28
        $region27: #{tpu_custom_call.1} parent=11 // pred_region
          _
        $region28: #{tpu_custom_call.1} parent=11 // pred_fallthru
          _
        // Predicated region
        $region29: #{tpu_custom_call.1} parent=11 // pred_check
          %p244 = pneg %p149
        $region30: #{tpu_custom_call.1} parent=11 // pred_check_branch
          %246 = sbr.rel (%p244) target = $region32
        $region31: #{tpu_custom_call.1} parent=11 // pred_region
          _
        $region32: #{tpu_custom_call.1} parent=11 // pred_fallthru
          _
        // Predicated region
        $region33: #{tpu_custom_call.1} parent=11 // pred_check
          %p247 = pneg %p170
        $region34: #{tpu_custom_call.1} parent=11 // pred_check_branch
          %249 = sbr.rel (%p247) target = $region36
        $region35: #{tpu_custom_call.1} parent=11 // pred_region
          %s251 = ssub.s32 64, 64
          %252 = vsyncadd [#allocation3], %s251
          %s254 = sshll.u32 [#allocation2], 4
          %s255 = int_to_ptr.vmem [resolvable:$true] %s254
          %257 = dma.hbm_to_vmem [thread:$0]  %s6, 64, %s255, [#allocation3]
        $region36: #{tpu_custom_call.1} parent=11 // pred_fallthru
          _
        // Predicated region
        $region37: #{tpu_custom_call.1} parent=11 // pred_check
          %p258 = pneg %p191
        $region38: #{tpu_custom_call.1} parent=11 // pred_check_branch
          %260 = sbr.rel (%p258) target = $region40
        $region39: #{tpu_custom_call.1} parent=11 // pred_region
          _
        $region40: #{tpu_custom_call.1} parent=11 // pred_fallthru
          _
      $region12: #{tpu_custom_call.1} parent=5 // pred_fallthru
        _
      %p261 = scmp.lt.s32.totalorder %s18, 2
      // Predicated region
      $region41: #{tpu_custom_call.1} parent=5 // pred_check
        %p262 = pneg %p261
      $region42: #{tpu_custom_call.1} parent=5 // pred_check_branch
        %264 = sbr.rel (%p262) target = $region44
      $region43: #{tpu_custom_call.1} parent=5 // pred_region
        // Predicated region
        $region45: #{tpu_custom_call.1} parent=43 // pred_check
          %p265 = pneg %p38
        $region46: #{tpu_custom_call.1} parent=43 // pred_check_branch
          %267 = sbr.rel (%p265) target = $region48
        $region47: #{tpu_custom_call.1} parent=43 // pred_region
          %p268 = scmp.lt.s32.totalorder %s18, 1
          %s269 = scalar_select %p268, %s18, 1
          %s270 = smul.addr %s269, 2
          %s271 = smul.addr %s270, 8
          %s272 = scalar_lea.vmem %s0, %s271
        $region48: #{tpu_custom_call.1} parent=43 // pred_fallthru
          _
      $region44: #{tpu_custom_call.1} parent=5 // pred_fallthru
        _
      %p273 = scmp.le.s32.totalorder 1, %s18
      %p274 = scmp.lt.s32.totalorder %s18, 3
      %p275 = pnand %p273, %p274
      %p276 = pneg %p275
      // Predicated region
      $region49: #{tpu_custom_call.1} parent=5 // pred_check
        _
      $region50: #{tpu_custom_call.1} parent=5 // pred_check_branch
        %278 = sbr.rel (%p275) target = $region52
      $region51: #{tpu_custom_call.1} parent=5 // pred_region
        %s279 = ssub.s32 %s18, 1
        // Predicated region
        $region53: #{tpu_custom_call.1} parent=51 // pred_check
          %p280 = pneg %p170
        $region54: #{tpu_custom_call.1} parent=51 // pred_check_branch
          %282 = sbr.rel (%p280) target = $region56
        $region55: #{tpu_custom_call.1} parent=51 // pred_region
          %283 = dma.done [#allocation3], 64
        $region56: #{tpu_custom_call.1} parent=51 // pred_fallthru
          _
        %p284 = scmp.lt.s32.totalorder %s23, 1
        %s285 = scalar_select %p284, %s23, 1
        %s286 = smul.addr %s285, 2
        %s287 = smul.addr %s286, 8
        %s288 = scalar_lea.vmem %s0, %s287
        %p289 = pneg %p44
        %p290 = pneg %p41
        %p291 = pneg %p65
        %p292 = pneg %p62
        %p293 = pneg %p86
        %p294 = pneg %p83
        %p295 = pneg %p107
        %p296 = pneg %p104
        %p297 = pneg %p128
        %p298 = pneg %p125
        %p299 = pneg %p149
        %p300 = pneg %p146
        %p301 = pneg %p170
        %p302 = pneg %p167
        %p303 = pneg %p191
        %p304 = pneg %p188
        %p305 = pneg %p217
        %p306 = pneg %p214
        %s307 = sand.u32 %s204, 1
        %s308 = scalar_lea.sflag [#allocation4], %s307
        %s309 = sand.u32 %s204, 1
        %s310 = smul.addr %s309, 16
        %s311 = scalar_lea.vmem [#allocation5], %s310
        %p312 = scmp.lt.s32.totalorder %s23, 1
        %s313 = scalar_select %p312, %s23, 1
        %s314 = smul.addr %s313, 2
        %s315 = smul.addr %s314, 8
        %s316 = scalar_lea.vmem %s0, %s315
        %v317 = vld [vmem:[%s7] sm:$0xff]
        %v318 = vld [vmem:[%s7 + $0x8] sm:$0xff]
        %v319 = vld [vmem:[#allocation2] sm:$0xf]
        %v320 = vld [vmem:[%s316] sm:$0xff]
        %v321 = vld [vmem:[%s316 + $0x8] sm:$0xff]
        %v322 = vld [vmem:[%s1] sm:$0xff]
        %v323 = vld [vmem:[%s1 + $0x8] sm:$0xff]
        %vm324 = vcmask 64512
        %v326 = vsel %vm324, %v322, 0
        %v329 = vsel %vm324, %v323, 0
        %331 = vmatprep.subr.mxu0 0.0
        %332 = vmatpush1.msra.mxu0 0.0
        %333 = vmatprep.subr.mxu0 0.0
        %334 = vmatpush1.msra.mxu0 0.0
        %335 = vmatprep.subr.mxu0 0.0
        %336 = vmatpush1.msra.mxu0 0.0
        %337 = vmatprep.subr.mxu0 0.0
        %338 = vmatpush1.msra.mxu0 0.0
        %339 = vmatprep.subr.mxu0 0.0
        %340 = vmatpush1.msra.mxu0 0.0
        %341 = vmatprep.subr.mxu0 0.0
        %342 = vmatpush1.msra.mxu0 0.0
        %343 = vmatprep.subr.mxu0 0.0
        %344 = vmatpush1.msra.mxu0 0.0
        %345 = vmatprep.subr.mxu0 0.0
        %346 = vmatpush1.msra.mxu0 0.0
        %347 = vmatprep.subr.mxu0 0.0
        %348 = vmatpush1.msra.mxu0 0.0
        %349 = vmatprep.subr.mxu0 0.0
        %350 = vmatpush1.msra.mxu0 0.0
        %351 = vmatprep.subr.mxu0 0.0
        %352 = vmatpush1.msra.mxu0 0.0
        %353 = vmatprep.subr.mxu0 0.0
        %354 = vmatpush1.msra.mxu0 0.0
        %355 = vmatprep.subr.mxu0 0.0
        %356 = vmatpush1.msra.mxu0 0.0
        %357 = vmatprep.subr.mxu0 0.0
        %358 = vmatpush1.msra.mxu0 0.0
        %359 = vmatprep.subr.mxu0 0.0
        %360 = vmatpush1.msra.mxu0 0.0
        %361 = vmatprep.subr.mxu0 %v321
        %362 = vmatpush1.msra.mxu0 %v320
        %363 = vmatprep.subr.mxu0 0.0
        %364 = vmatpush2.msra.mxu0 0.0
        %365 = vmatprep.subr.mxu0 0.0
        %366 = vmatpush2.msra.mxu0 0.0
        %367 = vmatprep.subr.mxu0 0.0
        %368 = vmatpush2.msra.mxu0 0.0
        %369 = vmatprep.subr.mxu0 0.0
        %370 = vmatpush2.msra.mxu0 0.0
        %371 = vmatprep.subr.mxu0 0.0
        %372 = vmatpush2.msra.mxu0 0.0
        %373 = vmatprep.subr.mxu0 0.0
        %374 = vmatpush2.msra.mxu0 0.0
        %375 = vmatprep.subr.mxu0 0.0
        %376 = vmatpush2.msra.mxu0 0.0
        %377 = vmatprep.subr.mxu0 0.0
        %378 = vmatpush2.msra.mxu0 0.0
        %379 = vmatprep.subr.mxu0 0.0
        %380 = vmatpush2.msra.mxu0 0.0
        %381 = vmatprep.subr.mxu0 0.0
        %382 = vmatpush2.msra.mxu0 0.0
        %383 = vmatprep.subr.mxu0 0.0
        %384 = vmatpush2.msra.mxu0 0.0
        %385 = vmatprep.subr.mxu0 0.0
        %386 = vmatpush2.msra.mxu0 0.0
        %387 = vmatprep.subr.mxu0 0.0
        %388 = vmatpush2.msra.mxu0 0.0
        %389 = vmatprep.subr.mxu0 0.0
        %390 = vmatpush2.msra.mxu0 0.0
        %391 = vmatprep.subr.mxu0 0.0
        %392 = vmatpush2.msra.mxu0 0.0
        %393 = vmatprep.subr.mxu0 0.0
        %394 = vmatpush2.msra.mxu0 0.0
        %395 = vmatprep.mubr.f32.mxu0 0.0
        %396 = vmatmul.mubr.f32.gmra.mxu0 %v326
        %v397 = vpop.f32.mrf.mxu0
        %v398 = vadd.f32 0.0, %v397
        %v399 = vpop.f32.mrf.mxu0
        %v400 = vadd.f32 0.0, %v399
        %401 = vmatprep.mubr.f32.mxu0 0.0
        %402 = vmatmul.mubr.f32.gmra.mxu0 %v329
        %v403 = vpop.f32.mrf.mxu0
        %v404 = vadd.f32 0.0, %v403
        %v405 = vpop.f32.mrf.mxu0
        %v406 = vadd.f32 0.0, %v405
        %407 = vdwg.mxu0
        %409 = vset.pattern.permute.xlu0 0
        %410 = vperm.xlu0 %409, %v317
        %v411 = vpop.permute.xlu0 %410
        %414 = vset.pattern.permute.xlu0 0
        %415 = vperm.xlu0 %414, %v318
        %v416 = vpop.permute.xlu0 %415
        %v418 = vmul.f32 %v398, %v411
        %v419 = vmul.f32 %v400, %v411
        %v420 = vmul.f32 %v404, %v416
        %v421 = vmul.f32 %v406, %v416
        %422 = vset.pattern.permute.xlu0 1
        %423 = vperm.xlu0 %422, %v317
        %v424 = vpop.permute.xlu0 %423
        %426 = vset.pattern.permute.xlu0 1
        %427 = vperm.xlu0 %426, %v318
        %v428 = vpop.permute.xlu0 %427
        %v430 = vadd.f32 %v418, %v424
        %v431 = vadd.f32 %v419, %v424
        %v432 = vadd.f32 %v420, %v428
        %v433 = vadd.f32 %v421, %v428
        %v434 = vadd.f32 %v430, 3.0
        %v435 = vadd.f32 %v431, 3.0
        %v436 = vadd.f32 %v432, 3.0
        %v437 = vadd.f32 %v433, 3.0
        %v438 = vmax.f32 %v434, 0.0
        %v439 = vmax.f32 %v435, 0.0
        %v440 = vmax.f32 %v436, 0.0
        %v441 = vmax.f32 %v437, 0.0
        %v442 = vmin.f32 %v438, 6.0
        %v443 = vmin.f32 %v439, 6.0
        %v444 = vmin.f32 %v440, 6.0
        %v445 = vmin.f32 %v441, 6.0
        %v446 = vmul.f32 %v442, 0.16666667
        %v447 = vmul.f32 %v443, 0.16666667
        %v448 = vmul.f32 %v444, 0.16666667
        %v449 = vmul.f32 %v445, 0.16666667
        %v450 = vmul.f32 %v430, %v446
        %v451 = vmul.f32 %v431, %v447
        %v452 = vmul.f32 %v432, %v448
        %v453 = vmul.f32 %v433, %v449
        %v454 = vld [vmem:[%s2] sm:$0xff]
        %v455 = vld [vmem:[%s2 + $0x8] sm:$0xff]
        %457 = vset.pattern.permute.xlu0 4
        %458 = vperm.xlu0 %457, %v454
        %v459 = vpop.permute.xlu0 %458
        %462 = vset.pattern.permute.xlu0 4
        %463 = vperm.xlu0 %462, %v455
        %v464 = vpop.permute.xlu0 %463
        %v466 = vmul.f32 %v450, %v459
        %v467 = vmul.f32 %v451, %v459
        %v468 = vmul.f32 %v452, %v464
        %v469 = vmul.f32 %v453, %v464
        %470 = vrot.lane.b32.xlu0 %v450, 17
        %v471 = vpop.permute.xlu0 %470
        %472 = vrot.lane.b32.xlu0 %v452, 17
        %v473 = vpop.permute.xlu0 %472
        %474 = vrot.lane.b32.xlu0 %v451, 17
        %v475 = vpop.permute.xlu0 %474
        %476 = vrot.lane.b32.xlu0 %v453, 17
        %v477 = vpop.permute.xlu0 %476
        %v478 = vlaneseq
        %v479 = vand.u32 %v478, 127
        %vm480 = vcmp.lt.s32.totalorder %v479, 17
        %v481 = vsel %vm480, %v471, %v475
        %v482 = vsel %vm480, %v473, %v477
        %v483 = vsel %vm480, %v475, %v471
        %v484 = vsel %vm480, %v477, %v473
        %vm485 = vcmp.ge.s32.totalorder %v319, 1
        %v486 = vsel %vm485, 1, 0
        %v487 = vrot.slane %v486, 7
        %vm488 = vcmp.ne.s32.totalorder %v487, 0
        %vm489 = vmand %vm485, %vm488
        %v490 = vsel %vm489, 1, 0
        %v491 = vlaneseq
        %v492 = vshrl.u32 %v491, 7
        %v493 = vsub.s32 1, %v492
        %v494 = vrot.slane %v490, %v493
        %v495 = vlaneseq
        %v496 = vshrl.u32 %v495, 7
        %v497 = vsub.s32 3, %v496
        %v498 = vrot.slane %v490, %v497
        %v499 = vlaneseq
        %v500 = vshrl.u32 %v499, 7
        %v501 = vsub.s32 1, %v500
        %v502 = vrot.slane %v494, %v501
        %v503 = vlaneseq
        %v504 = vshrl.u32 %v503, 7
        %v505 = vsub.s32 1, %v504
        %v506 = vrot.slane %v498, %v505
        %vm507 = vcmp.eq.s32.totalorder %v502, 1
        %vm508 = vcmp.eq.s32.totalorder %v506, 1
        %v509 = vsel %vm507, %v483, 0.0
        %v510 = vsel %vm508, %v481, 0.0
        %v511 = vsel %vm507, %v484, 0.0
        %v512 = vsel %vm508, %v482, 0.0
        %513 = vset.pattern.permute.xlu0 0
        %514 = vperm.xlu0 %513, %v454
        %v515 = vpop.permute.xlu0 %514
        %517 = vset.pattern.permute.xlu0 0
        %518 = vperm.xlu0 %517, %v455
        %v519 = vpop.permute.xlu0 %518
        %v521 = vmul.f32 %v509, %v515
        %v522 = vmul.f32 %v510, %v515
        %v523 = vmul.f32 %v511, %v519
        %v524 = vmul.f32 %v512, %v519
        %v525 = vadd.f32 %v466, %v521
        %v526 = vadd.f32 %v467, %v522
        %v527 = vadd.f32 %v468, %v523
        %v528 = vadd.f32 %v469, %v524
        %529 = vrot.lane.b32.xlu0 %v450, 16
        %v530 = vpop.permute.xlu0 %529
        %531 = vrot.lane.b32.xlu0 %v452, 16
        %v532 = vpop.permute.xlu0 %531
        %533 = vrot.lane.b32.xlu0 %v451, 16
        %v534 = vpop.permute.xlu0 %533
        %535 = vrot.lane.b32.xlu0 %v453, 16
        %v536 = vpop.permute.xlu0 %535
        %vm537 = vcmp.lt.s32.totalorder %v479, 16
        %v538 = vsel %vm537, %v530, %v534
        %v539 = vsel %vm537, %v532, %v536
        %v540 = vsel %vm537, %v534, %v530
        %v541 = vsel %vm537, %v536, %v532
        %v542 = vlaneseq
        %v543 = vshrl.u32 %v542, 7
        %v544 = vsub.s32 1, %v543
        %v545 = vrot.slane %v486, %v544
        %v546 = vlaneseq
        %v547 = vshrl.u32 %v546, 7
        %v548 = vsub.s32 3, %v547
        %v549 = vrot.slane %v486, %v548
        %v550 = vlaneseq
        %v551 = vshrl.u32 %v550, 7
        %v552 = vsub.s32 1, %v551
        %v553 = vrot.slane %v545, %v552
        %v554 = vlaneseq
        %v555 = vshrl.u32 %v554, 7
        %v556 = vsub.s32 1, %v555
        %v557 = vrot.slane %v549, %v556
        %vm558 = vcmp.eq.s32.totalorder %v553, 1
        %vm559 = vcmp.eq.s32.totalorder %v557, 1
        %v560 = vsel %vm558, %v540, 0.0
        %v561 = vsel %vm559, %v538, 0.0
        %v562 = vsel %vm558, %v541, 0.0
        %v563 = vsel %vm559, %v539, 0.0
        %564 = vset.pattern.permute.xlu0 1
        %565 = vperm.xlu0 %564, %v454
        %v566 = vpop.permute.xlu0 %565
        %568 = vset.pattern.permute.xlu0 1
        %569 = vperm.xlu0 %568, %v455
        %v570 = vpop.permute.xlu0 %569
        %v572 = vmul.f32 %v560, %v566
        %v573 = vmul.f32 %v561, %v566
        %v574 = vmul.f32 %v562, %v570
        %v575 = vmul.f32 %v563, %v570
        %v576 = vadd.f32 %v525, %v572
        %v577 = vadd.f32 %v526, %v573
        %v578 = vadd.f32 %v527, %v574
        %v579 = vadd.f32 %v528, %v575
        %580 = vrot.lane.b32.xlu0 %v450, 15
        %v581 = vpop.permute.xlu0 %580
        %582 = vrot.lane.b32.xlu0 %v452, 15
        %v583 = vpop.permute.xlu0 %582
        %584 = vrot.lane.b32.xlu0 %v451, 15
        %v585 = vpop.permute.xlu0 %584
        %586 = vrot.lane.b32.xlu0 %v453, 15
        %v587 = vpop.permute.xlu0 %586
        %vm588 = vcmp.lt.s32.totalorder %v479, 15
        %v589 = vsel %vm588, %v581, %v585
        %v590 = vsel %vm588, %v583, %v587
        %v591 = vsel %vm588, %v585, %v581
        %v592 = vsel %vm588, %v587, %v583
        %vm593 = vcmp.lt.s32.totalorder %v319, 15
        %v594 = vsel %vm593, 1, 0
        %v595 = vrot.slane %v594, 7
        %vm596 = vcmp.ne.s32.totalorder %v595, 0
        %vm597 = vmand %vm485, %vm596
        %v598 = vsel %vm597, 1, 0
        %v599 = vlaneseq
        %v600 = vshrl.u32 %v599, 7
        %v601 = vsub.s32 1, %v600
        %v602 = vrot.slane %v598, %v601
        %v603 = vlaneseq
        %v604 = vshrl.u32 %v603, 7
        %v605 = vsub.s32 3, %v604
        %v606 = vrot.slane %v598, %v605
        %v607 = vlaneseq
        %v608 = vshrl.u32 %v607, 7
        %v609 = vsub.s32 1, %v608
        %v610 = vrot.slane %v602, %v609
        %v611 = vlaneseq
        %v612 = vshrl.u32 %v611, 7
        %v613 = vsub.s32 1, %v612
        %v614 = vrot.slane %v606, %v613
        %vm615 = vcmp.eq.s32.totalorder %v610, 1
        %vm616 = vcmp.eq.s32.totalorder %v614, 1
        %v617 = vsel %vm615, %v591, 0.0
        %v618 = vsel %vm616, %v589, 0.0
        %v619 = vsel %vm615, %v592, 0.0
        %v620 = vsel %vm616, %v590, 0.0
        %621 = vset.pattern.permute.xlu0 2
        %622 = vperm.xlu0 %621, %v454
        %v623 = vpop.permute.xlu0 %622
        %625 = vset.pattern.permute.xlu0 2
        %626 = vperm.xlu0 %625, %v455
        %v627 = vpop.permute.xlu0 %626
        %v629 = vmul.f32 %v617, %v623
        %v630 = vmul.f32 %v618, %v623
        %v631 = vmul.f32 %v619, %v627
        %v632 = vmul.f32 %v620, %v627
        %v633 = vadd.f32 %v576, %v629
        %v634 = vadd.f32 %v577, %v630
        %v635 = vadd.f32 %v578, %v631
        %v636 = vadd.f32 %v579, %v632
        %637 = vrot.lane.b32.xlu0 %v450, 1
        %v638 = vpop.permute.xlu0 %637
        %639 = vrot.lane.b32.xlu0 %v452, 1
        %v640 = vpop.permute.xlu0 %639
        %641 = vrot.lane.b32.xlu0 %v451, 1
        %v642 = vpop.permute.xlu0 %641
        %643 = vrot.lane.b32.xlu0 %v453, 1
        %v644 = vpop.permute.xlu0 %643
        %vm645 = vcmp.lt.s32.totalorder %v479, 1
        %v646 = vsel %vm645, %v638, %v642
        %v647 = vsel %vm645, %v640, %v644
        %v648 = vsel %vm645, %v642, %v638
        %v649 = vsel %vm645, %v644, %v640
        %v650 = vlaneseq
        %v651 = vshrl.u32 %v650, 7
        %v652 = vsub.s32 0, %v651
        %v653 = vrot.slane %v486, %v652
        %v654 = vlaneseq
        %v655 = vshrl.u32 %v654, 7
        %v656 = vsub.s32 2, %v655
        %v657 = vrot.slane %v486, %v656
        %v658 = vlaneseq
        %v659 = vshrl.u32 %v658, 7
        %v660 = vsub.s32 0, %v659
        %v661 = vrot.slane %v653, %v660
        %v662 = vlaneseq
        %v663 = vshrl.u32 %v662, 7
        %v664 = vsub.s32 0, %v663
        %v665 = vrot.slane %v657, %v664
        %vm666 = vcmp.eq.s32.totalorder %v661, 1
        %vm667 = vcmp.eq.s32.totalorder %v665, 1
        %v668 = vsel %vm666, %v648, 0.0
        %v669 = vsel %vm667, %v646, 0.0
        %v670 = vsel %vm666, %v649, 0.0
        %v671 = vsel %vm667, %v647, 0.0
        %672 = vset.pattern.permute.xlu0 3
        %673 = vperm.xlu0 %672, %v454
        %v674 = vpop.permute.xlu0 %673
        %676 = vset.pattern.permute.xlu0 3
        %677 = vperm.xlu0 %676, %v455
        %v678 = vpop.permute.xlu0 %677
        %v680 = vmul.f32 %v668, %v674
        %v681 = vmul.f32 %v669, %v674
        %v682 = vmul.f32 %v670, %v678
        %v683 = vmul.f32 %v671, %v678
        %v684 = vadd.f32 %v633, %v680
        %v685 = vadd.f32 %v634, %v681
        %v686 = vadd.f32 %v635, %v682
        %v687 = vadd.f32 %v636, %v683
        %688 = vrot.lane.b32.xlu0 %v450, 127
        %v689 = vpop.permute.xlu0 %688
        %690 = vrot.lane.b32.xlu0 %v452, 127
        %v691 = vpop.permute.xlu0 %690
        %692 = vrot.lane.b32.xlu0 %v451, 127
        %v693 = vpop.permute.xlu0 %692
        %694 = vrot.lane.b32.xlu0 %v453, 127
        %v695 = vpop.permute.xlu0 %694
        %vm696 = vcmp.lt.s32.totalorder %v479, 127
        %v697 = vsel %vm696, %v689, %v693
        %v698 = vsel %vm696, %v691, %v695
        %v699 = vsel %vm696, %v693, %v689
        %v700 = vsel %vm696, %v695, %v691
        %v701 = vlaneseq
        %v702 = vshrl.u32 %v701, 7
        %v703 = vsub.s32 0, %v702
        %v704 = vrot.slane %v594, %v703
        %v705 = vlaneseq
        %v706 = vshrl.u32 %v705, 7
        %v707 = vsub.s32 2, %v706
        %v708 = vrot.slane %v594, %v707
        %v709 = vlaneseq
        %v710 = vshrl.u32 %v709, 7
        %v711 = vsub.s32 0, %v710
        %v712 = vrot.slane %v704, %v711
        %v713 = vlaneseq
        %v714 = vshrl.u32 %v713, 7
        %v715 = vsub.s32 0, %v714
        %v716 = vrot.slane %v708, %v715
        %vm717 = vcmp.eq.s32.totalorder %v712, 1
        %vm718 = vcmp.eq.s32.totalorder %v716, 1
        %v719 = vsel %vm717, %v697, 0.0
        %v720 = vsel %vm718, %v699, 0.0
        %v721 = vsel %vm717, %v698, 0.0
        %v722 = vsel %vm718, %v700, 0.0
        %723 = vset.pattern.permute.xlu0 5
        %724 = vperm.xlu0 %723, %v454
        %v725 = vpop.permute.xlu0 %724
        %727 = vset.pattern.permute.xlu0 5
        %728 = vperm.xlu0 %727, %v455
        %v729 = vpop.permute.xlu0 %728
        %v731 = vmul.f32 %v719, %v725
        %v732 = vmul.f32 %v720, %v725
        %v733 = vmul.f32 %v721, %v729
        %v734 = vmul.f32 %v722, %v729
        %v735 = vadd.f32 %v684, %v731
        %v736 = vadd.f32 %v685, %v732
        %v737 = vadd.f32 %v686, %v733
        %v738 = vadd.f32 %v687, %v734
        %739 = vrot.lane.b32.xlu0 %v450, 113
        %v740 = vpop.permute.xlu0 %739
        %741 = vrot.lane.b32.xlu0 %v452, 113
        %v742 = vpop.permute.xlu0 %741
        %743 = vrot.lane.b32.xlu0 %v451, 113
        %v744 = vpop.permute.xlu0 %743
        %745 = vrot.lane.b32.xlu0 %v453, 113
        %v746 = vpop.permute.xlu0 %745
        %vm747 = vcmp.lt.s32.totalorder %v479, 113
        %v748 = vsel %vm747, %v740, %v744
        %v749 = vsel %vm747, %v742, %v746
        %v750 = vsel %vm747, %v744, %v740
        %v751 = vsel %vm747, %v746, %v742
        %vm752 = vmand %vm593, %vm488
        %v753 = vsel %vm752, 1, 0
        %v754 = vlaneseq
        %v755 = vshrl.u32 %v754, 7
        %v756 = vsub.s32 1, %v755
        %v757 = vrot.slane %v753, %v756
        %v758 = vlaneseq
        %v759 = vshrl.u32 %v758, 7
        %v760 = vsub.s32 3, %v759
        %v761 = vrot.slane %v753, %v760
        %v762 = vlaneseq
        %v763 = vshrl.u32 %v762, 7
        %v764 = vsub.s32 1, %v763
        %v765 = vrot.slane %v757, %v764
        %v766 = vlaneseq
        %v767 = vshrl.u32 %v766, 7
        %v768 = vsub.s32 1, %v767
        %v769 = vrot.slane %v761, %v768
        %vm770 = vcmp.eq.s32.totalorder %v765, 1
        %vm771 = vcmp.eq.s32.totalorder %v769, 1
        %v772 = vsel %vm770, %v748, 0.0
        %v773 = vsel %vm771, %v750, 0.0
        %v774 = vsel %vm770, %v749, 0.0
        %v775 = vsel %vm771, %v751, 0.0
        %776 = vset.pattern.permute.xlu0 6
        %777 = vperm.xlu0 %776, %v454
        %v778 = vpop.permute.xlu0 %777
        %780 = vset.pattern.permute.xlu0 6
        %781 = vperm.xlu0 %780, %v455
        %v782 = vpop.permute.xlu0 %781
        %v784 = vmul.f32 %v772, %v778
        %v785 = vmul.f32 %v773, %v778
        %v786 = vmul.f32 %v774, %v782
        %v787 = vmul.f32 %v775, %v782
        %v788 = vadd.f32 %v735, %v784
        %v789 = vadd.f32 %v736, %v785
        %v790 = vadd.f32 %v737, %v786
        %v791 = vadd.f32 %v738, %v787
        %792 = vrot.lane.b32.xlu0 %v450, 112
        %v793 = vpop.permute.xlu0 %792
        %794 = vrot.lane.b32.xlu0 %v452, 112
        %v795 = vpop.permute.xlu0 %794
        %796 = vrot.lane.b32.xlu0 %v451, 112
        %v797 = vpop.permute.xlu0 %796
        %798 = vrot.lane.b32.xlu0 %v453, 112
        %v799 = vpop.permute.xlu0 %798
        %vm800 = vcmp.lt.s32.totalorder %v479, 112
        %v801 = vsel %vm800, %v793, %v797
        %v802 = vsel %vm800, %v795, %v799
        %v803 = vsel %vm800, %v797, %v793
        %v804 = vsel %vm800, %v799, %v795
        %v805 = vlaneseq
        %v806 = vshrl.u32 %v805, 7
        %v807 = vsub.s32 1, %v806
        %v808 = vrot.slane %v594, %v807
        %v809 = vlaneseq
        %v810 = vshrl.u32 %v809, 7
        %v811 = vsub.s32 3, %v810
        %v812 = vrot.slane %v594, %v811
        %v813 = vlaneseq
        %v814 = vshrl.u32 %v813, 7
        %v815 = vsub.s32 1, %v814
        %v816 = vrot.slane %v808, %v815
        %v817 = vlaneseq
        %v818 = vshrl.u32 %v817, 7
        %v819 = vsub.s32 1, %v818
        %v820 = vrot.slane %v812, %v819
        %vm821 = vcmp.eq.s32.totalorder %v816, 1
        %vm822 = vcmp.eq.s32.totalorder %v820, 1
        %v823 = vsel %vm821, %v801, 0.0
        %v824 = vsel %vm822, %v803, 0.0
        %v825 = vsel %vm821, %v802, 0.0
        %v826 = vsel %vm822, %v804, 0.0
        %827 = vset.pattern.permute.xlu0 7
        %828 = vperm.xlu0 %827, %v454
        %v829 = vpop.permute.xlu0 %828
        %831 = vset.pattern.permute.xlu0 7
        %832 = vperm.xlu0 %831, %v455
        %v833 = vpop.permute.xlu0 %832
        %v835 = vmul.f32 %v823, %v829
        %v836 = vmul.f32 %v824, %v829
        %v837 = vmul.f32 %v825, %v833
        %v838 = vmul.f32 %v826, %v833
        %v839 = vadd.f32 %v788, %v835
        %v840 = vadd.f32 %v789, %v836
        %v841 = vadd.f32 %v790, %v837
        %v842 = vadd.f32 %v791, %v838
        %843 = vrot.lane.b32.xlu0 %v450, 111
        %v844 = vpop.permute.xlu0 %843
        %845 = vrot.lane.b32.xlu0 %v452, 111
        %v846 = vpop.permute.xlu0 %845
        %847 = vrot.lane.b32.xlu0 %v451, 111
        %v848 = vpop.permute.xlu0 %847
        %849 = vrot.lane.b32.xlu0 %v453, 111
        %v850 = vpop.permute.xlu0 %849
        %vm851 = vcmp.lt.s32.totalorder %v479, 111
        %v852 = vsel %vm851, %v844, %v848
        %v853 = vsel %vm851, %v846, %v850
        %v854 = vsel %vm851, %v848, %v844
        %v855 = vsel %vm851, %v850, %v846
        %vm856 = vmand %vm593, %vm596
        %v857 = vsel %vm856, 1, 0
        %v858 = vlaneseq
        %v859 = vshrl.u32 %v858, 7
        %v860 = vsub.s32 1, %v859
        %v861 = vrot.slane %v857, %v860
        %v862 = vlaneseq
        %v863 = vshrl.u32 %v862, 7
        %v864 = vsub.s32 3, %v863
        %v865 = vrot.slane %v857, %v864
        %v866 = vlaneseq
        %v867 = vshrl.u32 %v866, 7
        %v868 = vsub.s32 1, %v867
        %v869 = vrot.slane %v861, %v868
        %v870 = vlaneseq
        %v871 = vshrl.u32 %v870, 7
        %v872 = vsub.s32 1, %v871
        %v873 = vrot.slane %v865, %v872
        %vm874 = vcmp.eq.s32.totalorder %v869, 1
        %vm875 = vcmp.eq.s32.totalorder %v873, 1
        %v876 = vsel %vm874, %v852, 0.0
        %v877 = vsel %vm875, %v854, 0.0
        %v878 = vsel %vm874, %v853, 0.0
        %v879 = vsel %vm875, %v855, 0.0
        %880 = vset.pattern.permute.xlu0 8
        %881 = vperm.xlu0 %880, %v454
        %v882 = vpop.permute.xlu0 %881
        %884 = vset.pattern.permute.xlu0 8
        %885 = vperm.xlu0 %884, %v455
        %v886 = vpop.permute.xlu0 %885
        %v888 = vmul.f32 %v876, %v882
        %v889 = vmul.f32 %v877, %v882
        %v890 = vmul.f32 %v878, %v886
        %v891 = vmul.f32 %v879, %v886
        %v892 = vadd.f32 %v839, %v888
        %v893 = vadd.f32 %v840, %v889
        %v894 = vadd.f32 %v841, %v890
        %v895 = vadd.f32 %v842, %v891
        %896 = vset.pattern.permute.xlu0 2
        %897 = vperm.xlu0 %896, %v317
        %v898 = vpop.permute.xlu0 %897
        %900 = vset.pattern.permute.xlu0 2
        %901 = vperm.xlu0 %900, %v318
        %v902 = vpop.permute.xlu0 %901
        %v904 = vmul.f32 %v892, %v898
        %v905 = vmul.f32 %v893, %v898
        %v906 = vmul.f32 %v894, %v902
        %v907 = vmul.f32 %v895, %v902
        %908 = vset.pattern.permute.xlu0 3
        %909 = vperm.xlu0 %908, %v317
        %v910 = vpop.permute.xlu0 %909
        %912 = vset.pattern.permute.xlu0 3
        %913 = vperm.xlu0 %912, %v318
        %v914 = vpop.permute.xlu0 %913
        %v916 = vadd.f32 %v904, %v910
        %v917 = vadd.f32 %v905, %v910
        %v918 = vadd.f32 %v906, %v914
        %v919 = vadd.f32 %v907, %v914
        %v920 = vadd.f32 %v892, %v893
        %921 = vadd.xlane.f32.xlu0 %v920
        %v922 = vpop.xlane.xlu0 %921
        %v923 = vadd.f32 %v894, %v895
        %924 = vadd.xlane.f32.xlu0 %v923
        %v925 = vpop.xlane.xlu0 %924
        %v926 = vmul.f32 %v922, 0.00390625
        %v927 = vmul.f32 %v925, 0.00390625
        %v928 = vmul.f32 %v926, %v317
        %v929 = vmul.f32 %v927, %v318
        %930 = vrot.lane.b32.xlu0 %v317, 127
        %v931 = vpop.permute.xlu0 %930
        %932 = vrot.lane.b32.xlu0 %v318, 127
        %v933 = vpop.permute.xlu0 %932
        %v936 = vadd.f32 %v928, %v931
        %v937 = vadd.f32 %v929, %v933
        %v938 = vld [vmem:[%s3] sm:$0xff]
        %941 = vrot.lane.b32.xlu0 %v936, 126
        %v942 = vpop.permute.xlu0 %941
        %943 = vrot.lane.b32.xlu0 %v937, 126
        %v944 = vpop.permute.xlu0 %943
        %947 = vrot.lane.b32.xlu0 %v317, 123
        %v948 = vpop.permute.xlu0 %947
        %vm950 = vcmask 130048
        %v952 = vsel %vm950, %v938, 0
        %954 = vmatprep.subr.mxu0 0.0
        %955 = vmatpush1.msra.mxu0 0.0
        %956 = vmatprep.subr.mxu0 0.0
        %957 = vmatpush1.msra.mxu0 0.0
        %958 = vmatprep.subr.mxu0 0.0
        %959 = vmatpush1.msra.mxu0 0.0
        %960 = vmatprep.subr.mxu0 0.0
        %961 = vmatpush1.msra.mxu0 0.0
        %962 = vmatprep.subr.mxu0 0.0
        %963 = vmatpush1.msra.mxu0 0.0
        %964 = vmatprep.subr.mxu0 0.0
        %965 = vmatpush1.msra.mxu0 0.0
        %966 = vmatprep.subr.mxu0 0.0
        %967 = vmatpush1.msra.mxu0 0.0
        %968 = vmatprep.subr.mxu0 0.0
        %969 = vmatpush1.msra.mxu0 0.0
        %970 = vmatprep.subr.mxu0 0.0
        %971 = vmatpush1.msra.mxu0 0.0
        %972 = vmatprep.subr.mxu0 0.0
        %973 = vmatpush1.msra.mxu0 0.0
        %974 = vmatprep.subr.mxu0 0.0
        %975 = vmatpush1.msra.mxu0 0.0
        %976 = vmatprep.subr.mxu0 0.0
        %977 = vmatpush1.msra.mxu0 0.0
        %978 = vmatprep.subr.mxu0 0.0
        %979 = vmatpush1.msra.mxu0 0.0
        %980 = vmatprep.subr.mxu0 0.0
        %981 = vmatpush1.msra.mxu0 0.0
        %982 = vmatprep.subr.mxu0 0.0
        %983 = vmatpush1.msra.mxu0 %v944
        %984 = vmatprep.subr.mxu0 0.0
        %985 = vmatpush1.msra.mxu0 %v942
        %986 = vmatprep.subr.mxu0 0.0
        %987 = vmatpush2.msra.mxu0 0.0
        %988 = vmatprep.subr.mxu0 0.0
        %989 = vmatpush2.msra.mxu0 0.0
        %990 = vmatprep.subr.mxu0 0.0
        %991 = vmatpush2.msra.mxu0 0.0
        %992 = vmatprep.subr.mxu0 0.0
        %993 = vmatpush2.msra.mxu0 0.0
        %994 = vmatprep.subr.mxu0 0.0
        %995 = vmatpush2.msra.mxu0 0.0
        %996 = vmatprep.subr.mxu0 0.0
        %997 = vmatpush2.msra.mxu0 0.0
        %998 = vmatprep.subr.mxu0 0.0
        %999 = vmatpush2.msra.mxu0 0.0
        %1000 = vmatprep.subr.mxu0 0.0
        %1001 = vmatpush2.msra.mxu0 0.0
        %1002 = vmatprep.subr.mxu0 0.0
        %1003 = vmatpush2.msra.mxu0 0.0
        %1004 = vmatprep.subr.mxu0 0.0
        %1005 = vmatpush2.msra.mxu0 0.0
        %1006 = vmatprep.subr.mxu0 0.0
        %1007 = vmatpush2.msra.mxu0 0.0
        %1008 = vmatprep.subr.mxu0 0.0
        %1009 = vmatpush2.msra.mxu0 0.0
        %1010 = vmatprep.subr.mxu0 0.0
        %1011 = vmatpush2.msra.mxu0 0.0
        %1012 = vmatprep.subr.mxu0 0.0
        %1013 = vmatpush2.msra.mxu0 0.0
        %1014 = vmatprep.subr.mxu0 0.0
        %1015 = vmatpush2.msra.mxu0 0.0
        %1016 = vmatprep.subr.mxu0 0.0
        %1017 = vmatpush2.msra.mxu0 0.0
        %1018 = vmatprep.mubr.f32.mxu0 0.0
        %1019 = vmatmul.mubr.f32.gmra.mxu0 %v952
        %v1020 = vpop.f32.mrf.mxu0
        %v1021 = vadd.f32 %v948, %v1020
        %v1022 = vpop.f32.mrf.mxu0
        %1023 = vdwg.mxu0
        %v1024 = vmax.f32 %v1021, 0.0
        %v1025 = vld [vmem:[%s4] sm:$0xff]
        %v1026 = vld [vmem:[%s4 + $0x8] sm:$0xff]
        %1027 = vrot.lane.b32.xlu0 %v317, 124
        %v1028 = vpop.permute.xlu0 %1027
        %1029 = vrot.lane.b32.xlu0 %v318, 124
        %v1030 = vpop.permute.xlu0 %1029
        %v1034 = vsel %vm324, %v1025, 0
        %v1037 = vsel %vm324, %v1026, 0
        %1039 = vmatprep.subr.mxu0 0.0
        %1040 = vmatpush1.msra.mxu0 0.0
        %1041 = vmatprep.subr.mxu0 0.0
        %1042 = vmatpush1.msra.mxu0 0.0
        %1043 = vmatprep.subr.mxu0 0.0
        %1044 = vmatpush1.msra.mxu0 0.0
        %1045 = vmatprep.subr.mxu0 0.0
        %1046 = vmatpush1.msra.mxu0 0.0
        %1047 = vmatprep.subr.mxu0 0.0
        %1048 = vmatpush1.msra.mxu0 0.0
        %1049 = vmatprep.subr.mxu0 0.0
        %1050 = vmatpush1.msra.mxu0 0.0
        %1051 = vmatprep.subr.mxu0 0.0
        %1052 = vmatpush1.msra.mxu0 0.0
        %1053 = vmatprep.subr.mxu0 0.0
        %1054 = vmatpush1.msra.mxu0 0.0
        %1055 = vmatprep.subr.mxu0 0.0
        %1056 = vmatpush1.msra.mxu0 0.0
        %1057 = vmatprep.subr.mxu0 0.0
        %1058 = vmatpush1.msra.mxu0 0.0
        %1059 = vmatprep.subr.mxu0 0.0
        %1060 = vmatpush1.msra.mxu0 0.0
        %1061 = vmatprep.subr.mxu0 0.0
        %1062 = vmatpush1.msra.mxu0 0.0
        %1063 = vmatprep.subr.mxu0 0.0
        %1064 = vmatpush1.msra.mxu0 0.0
        %1065 = vmatprep.subr.mxu0 0.0
        %1066 = vmatpush1.msra.mxu0 0.0
        %1067 = vmatprep.subr.mxu0 0.0
        %1068 = vmatpush1.msra.mxu0 0.0
        %1069 = vmatprep.subr.mxu0 0.0
        %1070 = vmatpush1.msra.mxu0 %v1024
        %1071 = vmatprep.subr.mxu0 0.0
        %1072 = vmatpush2.msra.mxu0 0.0
        %1073 = vmatprep.subr.mxu0 0.0
        %1074 = vmatpush2.msra.mxu0 0.0
        %1075 = vmatprep.subr.mxu0 0.0
        %1076 = vmatpush2.msra.mxu0 0.0
        %1077 = vmatprep.subr.mxu0 0.0
        %1078 = vmatpush2.msra.mxu0 0.0
        %1079 = vmatprep.subr.mxu0 0.0
        %1080 = vmatpush2.msra.mxu0 0.0
        %1081 = vmatprep.subr.mxu0 0.0
        %1082 = vmatpush2.msra.mxu0 0.0
        %1083 = vmatprep.subr.mxu0 0.0
        %1084 = vmatpush2.msra.mxu0 0.0
        %1085 = vmatprep.subr.mxu0 0.0
        %1086 = vmatpush2.msra.mxu0 0.0
        %1087 = vmatprep.subr.mxu0 0.0
        %1088 = vmatpush2.msra.mxu0 0.0
        %1089 = vmatprep.subr.mxu0 0.0
        %1090 = vmatpush2.msra.mxu0 0.0
        %1091 = vmatprep.subr.mxu0 0.0
        %1092 = vmatpush2.msra.mxu0 0.0
        %1093 = vmatprep.subr.mxu0 0.0
        %1094 = vmatpush2.msra.mxu0 0.0
        %1095 = vmatprep.subr.mxu0 0.0
        %1096 = vmatpush2.msra.mxu0 0.0
        %1097 = vmatprep.subr.mxu0 0.0
        %1098 = vmatpush2.msra.mxu0 0.0
        %1099 = vmatprep.subr.mxu0 0.0
        %1100 = vmatpush2.msra.mxu0 0.0
        %1101 = vmatprep.subr.mxu0 0.0
        %1102 = vmatpush2.msra.mxu0 0.0
        %1103 = vmatprep.mubr.f32.mxu0 0.0
        %1104 = vmatmul.mubr.f32.gmra.mxu0 %v1034
        %v1105 = vpop.f32.mrf.mxu0
        %v1106 = vadd.f32 %v1028, %v1105
        %v1107 = vpop.f32.mrf.mxu0
        %1108 = vmatprep.mubr.f32.mxu0 0.0
        %1109 = vmatmul.mubr.f32.gmra.mxu0 %v1037
        %v1110 = vpop.f32.mrf.mxu0
        %v1111 = vadd.f32 %v1030, %v1110
        %v1112 = vpop.f32.mrf.mxu0
        %1113 = vdwg.mxu0
        %v1114 = vadd.f32 %v1106, 3.0
        %v1115 = vadd.f32 %v1111, 3.0
        %v1116 = vmax.f32 %v1114, 0.0
        %v1117 = vmax.f32 %v1115, 0.0
        %v1118 = vmin.f32 %v1116, 6.0
        %v1119 = vmin.f32 %v1117, 6.0
        %v1120 = vmul.f32 %v1118, 0.16666667
        %v1121 = vmul.f32 %v1119, 0.16666667
        %1123 = vset.pattern.permute.xlu0 0
        %1124 = vperm.xlu0 %1123, %v1120
        %v1125 = vpop.permute.xlu0 %1124
        %1128 = vset.pattern.permute.xlu0 0
        %1129 = vperm.xlu0 %1128, %v1121
        %v1130 = vpop.permute.xlu0 %1129
        %v1132 = vmul.f32 %v916, %v1125
        %v1133 = vmul.f32 %v917, %v1125
        %v1134 = vmul.f32 %v918, %v1130
        %v1135 = vmul.f32 %v919, %v1130
        %v1136 = vadd.f32 %v1132, 3.0
        %v1137 = vadd.f32 %v1133, 3.0
        %v1138 = vadd.f32 %v1134, 3.0
        %v1139 = vadd.f32 %v1135, 3.0
        %v1140 = vmax.f32 %v1136, 0.0
        %v1141 = vmax.f32 %v1137, 0.0
        %v1142 = vmax.f32 %v1138, 0.0
        %v1143 = vmax.f32 %v1139, 0.0
        %v1144 = vmin.f32 %v1140, 6.0
        %v1145 = vmin.f32 %v1141, 6.0
        %v1146 = vmin.f32 %v1142, 6.0
        %v1147 = vmin.f32 %v1143, 6.0
        %v1148 = vmul.f32 %v1144, 0.16666667
        %v1149 = vmul.f32 %v1145, 0.16666667
        %v1150 = vmul.f32 %v1146, 0.16666667
        %v1151 = vmul.f32 %v1147, 0.16666667
        %v1152 = vmul.f32 %v1132, %v1148
        %v1153 = vmul.f32 %v1133, %v1149
        %v1154 = vmul.f32 %v1134, %v1150
        %v1155 = vmul.f32 %v1135, %v1151
        %v1156 = vld [vmem:[%s5] sm:$0xff]
        %v1158 = vsel %vm950, %v1156, 0
        %1160 = vmatprep.subr.mxu0 0.0
        %1161 = vmatpush1.msra.mxu0 0.0
        %1162 = vmatprep.subr.mxu0 0.0
        %1163 = vmatpush1.msra.mxu0 0.0
        %1164 = vmatprep.subr.mxu0 0.0
        %1165 = vmatpush1.msra.mxu0 0.0
        %1166 = vmatprep.subr.mxu0 0.0
        %1167 = vmatpush1.msra.mxu0 0.0
        %1168 = vmatprep.subr.mxu0 0.0
        %1169 = vmatpush1.msra.mxu0 0.0
        %1170 = vmatprep.subr.mxu0 0.0
        %1171 = vmatpush1.msra.mxu0 0.0
        %1172 = vmatprep.subr.mxu0 0.0
        %1173 = vmatpush1.msra.mxu0 0.0
        %1174 = vmatprep.subr.mxu0 0.0
        %1175 = vmatpush1.msra.mxu0 0.0
        %1176 = vmatprep.subr.mxu0 0.0
        %1177 = vmatpush1.msra.mxu0 0.0
        %1178 = vmatprep.subr.mxu0 0.0
        %1179 = vmatpush1.msra.mxu0 0.0
        %1180 = vmatprep.subr.mxu0 0.0
        %1181 = vmatpush1.msra.mxu0 0.0
        %1182 = vmatprep.subr.mxu0 0.0
        %1183 = vmatpush1.msra.mxu0 0.0
        %1184 = vmatprep.subr.mxu0 0.0
        %1185 = vmatpush1.msra.mxu0 0.0
        %1186 = vmatprep.subr.mxu0 0.0
        %1187 = vmatpush1.msra.mxu0 0.0
        %1188 = vmatprep.subr.mxu0 %v1155
        %1189 = vmatpush1.msra.mxu0 %v1154
        %1190 = vmatprep.subr.mxu0 %v1153
        %1191 = vmatpush1.msra.mxu0 %v1152
        %1192 = vmatprep.subr.mxu0 0.0
        %1193 = vmatpush2.msra.mxu0 0.0
        %1194 = vmatprep.subr.mxu0 0.0
        %1195 = vmatpush2.msra.mxu0 0.0
        %1196 = vmatprep.subr.mxu0 0.0
        %1197 = vmatpush2.msra.mxu0 0.0
        %1198 = vmatprep.subr.mxu0 0.0
        %1199 = vmatpush2.msra.mxu0 0.0
        %1200 = vmatprep.subr.mxu0 0.0
        %1201 = vmatpush2.msra.mxu0 0.0
        %1202 = vmatprep.subr.mxu0 0.0
        %1203 = vmatpush2.msra.mxu0 0.0
        %1204 = vmatprep.subr.mxu0 0.0
        %1205 = vmatpush2.msra.mxu0 0.0
        %1206 = vmatprep.subr.mxu0 0.0
        %1207 = vmatpush2.msra.mxu0 0.0
        %1208 = vmatprep.subr.mxu0 0.0
        %1209 = vmatpush2.msra.mxu0 0.0
        %1210 = vmatprep.subr.mxu0 0.0
        %1211 = vmatpush2.msra.mxu0 0.0
        %1212 = vmatprep.subr.mxu0 0.0
        %1213 = vmatpush2.msra.mxu0 0.0
        %1214 = vmatprep.subr.mxu0 0.0
        %1215 = vmatpush2.msra.mxu0 0.0
        %1216 = vmatprep.subr.mxu0 0.0
        %1217 = vmatpush2.msra.mxu0 0.0
        %1218 = vmatprep.subr.mxu0 0.0
        %1219 = vmatpush2.msra.mxu0 0.0
        %1220 = vmatprep.subr.mxu0 0.0
        %1221 = vmatpush2.msra.mxu0 0.0
        %1222 = vmatprep.subr.mxu0 0.0
        %1223 = vmatpush2.msra.mxu0 0.0
        %1224 = vmatprep.mubr.f32.mxu0 0.0
        %1225 = vmatmul.mubr.f32.gmra.mxu0 %v1158
        %v1226 = vpop.f32.mrf.mxu0
        %v1227 = vadd.f32 0.0, %v1226
        %v1228 = vpop.f32.mrf.mxu0
        %v1229 = vadd.f32 0.0, %v1228
        %1230 = vdwg.mxu0
        %1231 = vset.pattern.permute.xlu0 6
        %1232 = vperm.xlu0 %1231, %v317
        %v1233 = vpop.permute.xlu0 %1232
        %v1235 = vmul.f32 %v1227, %v1233
        %v1236 = vmul.f32 %v1229, %v1233
        %1237 = vset.pattern.permute.xlu0 7
        %1238 = vperm.xlu0 %1237, %v317
        %v1239 = vpop.permute.xlu0 %1238
        %v1241 = vadd.f32 %v1235, %v1239
        %v1242 = vadd.f32 %v1236, %v1239
        %v1243 = vadd.f32 %v1241, %v320
        %v1244 = vadd.f32 %v1242, %v321
        %1245 = vst [vmem:[%s311] sm:$0xff] %v1243
        %1246 = vst [vmem:[%s311 + $0x8] sm:$0xff] %v1244
        %s1247 = sand.u32 %s204, 1
        %s1248 = scalar_lea.sflag [#allocation4], %s1247
        %s1249 = sand.u32 %s204, 1
        %s1250 = smul.addr %s1249, 16
        %s1251 = scalar_lea.vmem [#allocation5], %s1250
        // Predicated region
        $region57: #{tpu_custom_call.1} parent=51 // pred_check
          %p1252 = pneg %p214
        $region58: #{tpu_custom_call.1} parent=51 // pred_check_branch
          %1254 = sbr.rel (%p1252) target = $region60
        $region59: #{tpu_custom_call.1} parent=51 // pred_region
          %s1256 = ssub.s32 256, 256
          %1257 = vsyncadd %s1248, %s1256
          %s1258 = smul.addr %s23, 2
          %s1259 = smul.addr %s1258, 128
          %s1260 = scalar_lea.hbm %s8, %s1259
          %s1262 = sshll.u32 %s1251, 4
          %s1263 = int_to_ptr.vmem [resolvable:$true] %s1262
          %1265 = dma.vmem_to_hbm [thread:$0]  %s1263, 256, %s1260, %s1248
        $region60: #{tpu_custom_call.1} parent=51 // pred_fallthru
          _
      $region52: #{tpu_custom_call.1} parent=5 // pred_fallthru
        _
      %p1266 = scmp.le.s32.totalorder 2, %s18
      // Predicated region
      $region61: #{tpu_custom_call.1} parent=5 // pred_check
        %p1267 = pneg %p1266
      $region62: #{tpu_custom_call.1} parent=5 // pred_check_branch
        %1269 = sbr.rel (%p1267) target = $region64
      $region63: #{tpu_custom_call.1} parent=5 // pred_region
        %s1270 = ssub.s32 %s18, 2
        // Predicated region
        $region65: #{tpu_custom_call.1} parent=63 // pred_check
          %p1271 = pneg %p220
        $region66: #{tpu_custom_call.1} parent=63 // pred_check_branch
          %1273 = sbr.rel (%p1271) target = $region68
        $region67: #{tpu_custom_call.1} parent=63 // pred_region
          %s1274 = sand.u32 %s205, 1
          %s1275 = scalar_lea.sflag [#allocation4], %s1274
          %s1276 = sand.u32 %s205, 1
          %s1277 = smul.addr %s1276, 16
          %s1278 = scalar_lea.vmem [#allocation5], %s1277
          %1279 = dma.done %s1275, 256
        $region68: #{tpu_custom_call.1} parent=63 // pred_fallthru
          _
      $region64: #{tpu_custom_call.1} parent=5 // pred_fallthru
        _
    $region6: #{tpu_custom_call.1} parent=1 // loop_footer
      %s22 = sadd.s32 1, %s18
    $region7: #{tpu_custom_call.1} parent=1 // loop_footer_branch
      %17 = sbr.rel target = $region3
    $region8: #{tpu_custom_call.1} parent=1 // loop_exit
      _
    %1280 = vsyncpa [#allocation3], 1
    %s1281 = scalar_lea.sflag [#allocation3], 1
    %1282 = vsyncpa %s1281, 1
    %1283 = vsyncpa [#allocation4], 1
    %s1284 = scalar_lea.sflag [#allocation4], 1
    %1285 = vsyncpa %s1284, 1

</llo_original>
